<compile_context>
chip_gen: v7x
topology: tpu7x:2x2x1
jax: 0.10.0
libtpu: 0.0.40
codegen_flags: <defaults>
</compile_context>

<pallas_src>
import jax
import jax.numpy as jnp
from jax import lax
from jax.experimental import pallas as pl
from jax.experimental.pallas import tpu as pltpu


# ------------------- shared math (Pallas kernels + mirror reference) ----------------

def _mm(lhs, rhs):
    """bf16 operands, f32 accumulation on the MXU."""
    return jnp.dot(lhs.astype(jnp.bfloat16), rhs.astype(jnp.bfloat16),
                   preferred_element_type=jnp.float32)


def _graph_norm(h, gamma, beta, alpha, ones8):
    """GraphNorm over all rows of h (batch=None inside the GNN).

    Column stats go through the MXU: (8,N) ones @ (N,HID) gives 8 identical rows;
    take row 0. Single-pass variance, clamped at 0 before rsqrt."""
    inv_n = 1.0 / h.shape[0]
    m = _mm(ones8, h)[0:1] * inv_n
    m2 = _mm(ones8, h * h)[0:1] * inv_n
    var = jnp.maximum(m2 - (2.0 * alpha - alpha * alpha) * (m * m), 0.0)
    return gamma * (h - alpha * m) * lax.rsqrt(var + 1e-5) + beta


def _gnn_batch_math(a, x, pool_a, w0, w1, w2,
                    b0, g0, be0, al0, b1, g1, be1, al1, b2):
    """3-layer GCN with GraphNorm/ReLU; mean pool hoisted through layer 2."""
    ones8 = jnp.ones((8, a.shape[0]), jnp.bfloat16)

    # Layer 0 (x zero-padded to HID lanes, W0 zero-padded rows -> exact).
    h = _mm(_mm(a, x), w0) + b0
    h = jnp.maximum(_graph_norm(h, g0, be0, al0, ones8), 0.0)
    h = h.astype(jnp.bfloat16)                 # single bf16 cast per layer

    # Layer 1.
    h = _mm(a, _mm(h, w1)) + b1
    h = jnp.maximum(_graph_norm(h, g1, be1, al1, ones8), 0.0)
    h = h.astype(jnp.bfloat16)

    # Layer 2 fused with global_mean_pool:
    #   pool @ (A @ (h @ W2) + b2) == ((pool @ A) @ h) @ W2 + b2
    # (no norm/activation on layer 2; mean-pool rows sum to 1).
    return _mm(_mm(pool_a, h), w2) + b2        # (B, HID) f32


def _head_math(pooled, wh1, wh2, bh1, bh2):
    z = jnp.maximum(_mm(pooled, wh1) + bh1, 0.0)
    return _mm(z, wh2) + bh2


# ----------------------------------- Pallas kernels ---------------------------------

def gnn_kernel(a_ref, x_ref, pa_ref, w_ref, p_ref, pooled_ref):
    p = p_ref[...]                                       # (9, HID) f32, packed params
    pooled_ref[...] = _gnn_batch_math(
        a_ref[...], x_ref[...], pa_ref[...],
        w_ref[0], w_ref[1], w_ref[2],
        p[0:1], p[1:2], p[2:3], p[3:4],
        p[4:5], p[5:6], p[6:7], p[7:8], p[8:9])


def head_kernel(pooled_ref, w_ref, p_ref, out_ref):
    p = p_ref[...]                                       # (2, HID) f32
    out_ref[...] = _head_math(pooled_ref[...], w_ref[0], w_ref[1], p[0:1], p[1:2])


def graph_encoder_forward(a_hat, x_pad, pool_a, w_gnn, p_gnn, w_head, p_head, nout):
    G, N, _ = a_hat.shape
    B = pool_a.shape[1]
    HID = w_gnn.shape[-1]

    # Stage 1: per-graph-batch GCN + fused mean pool. 'parallel' grid over the G
    # independent batches (megacore on v7x, double-buffered per-batch DMAs).
    # TODO(synk): for graphs beyond a few thousand nodes the dense all-in-VMEM A_hat
    #             stops fitting (64 MiB on v7x); tile A row-panels per generation.
    pooled = pl.pallas_call(
        gnn_kernel,
        out_shape=jax.ShapeDtypeStruct((G, B, HID), jnp.float32),
        grid_spec=pltpu.PrefetchScalarGridSpec(
            num_scalar_prefetch=0,
            grid=(G,),
            in_specs=[
                pl.BlockSpec((None, N, N), lambda g: (g, 0, 0)),     # A_hat[g]
                pl.BlockSpec((None, N, HID), lambda g: (g, 0, 0)),   # x_pad[g]
                pl.BlockSpec((None, B, N), lambda g: (g, 0, 0)),     # pool_a[g]
                pl.BlockSpec((3, HID, HID), lambda g: (0, 0, 0)),    # packed weights
                pl.BlockSpec((9, HID), lambda g: (0, 0)),            # packed params
            ],
            out_specs=pl.BlockSpec((None, B, HID), lambda g: (g, 0, 0)),
        ),
        compiler_params=pltpu.CompilerParams(dimension_semantics=("parallel",)),
    )(a_hat, x_pad, pool_a, w_gnn, p_gnn)

    # Stage 2: head run once at M = G*B rows (hoisted out of the per-batch body).
    vmem = pl.BlockSpec(memory_space=pltpu.MemorySpace.VMEM)
    out = pl.pallas_call(
        head_kernel,
        out_shape=jax.ShapeDtypeStruct((G * B, HID), jnp.float32),
        in_specs=[vmem, vmem, vmem],
        out_specs=vmem,
    )(pooled.reshape(G * B, HID), w_head, p_head)
    return out[:, :nout]


# -------------------------------------- JAX glue ------------------------------------

def build_norm_adj(edge_index, num_nodes):
    """Dense D^{-1/2}(A + I)D^{-1/2}; A[dst, src] = 1 (messages flow src->dst).
    Note: .at[].set dedups repeated edges (none in the test graphs)."""
    src, dst = edge_index
    a = jnp.zeros((num_nodes, num_nodes), jnp.float32).at[dst, src].set(1.0)
    a = a + jnp.eye(num_nodes, dtype=jnp.float32)
    deg = jnp.sum(a, axis=1)
    dinv = jnp.where(deg > 0, 1.0 / jnp.sqrt(deg), 0.0)
    return dinv[:, None] * a * dinv[None, :]


def build_mean_pool(batch, num_nodes, num_graphs):
    one_hot = (batch[None, :] == jnp.arange(num_graphs)[:, None]).astype(jnp.float32)
    counts = jnp.maximum(one_hot.sum(axis=1, keepdims=True), 1.0)
    return one_hot / counts                                   # (B, N)


def reference_forward_f32(a_hat, x, pool, params):
    """Pure-f32 reference in the original (unfused, unpadded) computation order."""
    (w0, b0, g0, be0, al0, w1, b1, g1, be1, al1, w2, b2, wh1, bh1, wh2, bh2) = params

    def gnorm(h, g, be, al):
        m = h.mean(0, keepdims=True)
        c = h - al * m
        v = (c * c).mean(0, keepdims=True)
        return g * c * lax.rsqrt(v + 1e-5) + be

    h = jnp.maximum(gnorm(a_hat @ (x @ w0) + b0, g0, be0, al0), 0.0)
    h = jnp.maximum(gnorm(a_hat @ (h @ w1) + b1, g1, be1, al1), 0.0)
    h = a_hat @ (h @ w2) + b2
    pooled = pool @ h
    z = jnp.maximum(pooled @ wh1 + bh1, 0.0)
    return z @ wh2 + bh2


# ---------------------------------------- main ---------------------------------------

if __name__ == "__main__":
    # GraphEncoder('gcn', num_node_features=16, graph_hidden_channels=128,
    #              nhid=128, nout=64, dropout=0, num_layers=3)
    F_IN, HID, NHID, NOUT = 16, 128, 128, 64
    G_BATCHES = 4                   # independent graph-batches (one forward call each)
    B_GRAPHS, NODES_PER = 8, 32     # graphs per batch, nodes per graph
    N_NODES = B_GRAPHS * NODES_PER  # 256 node rows per batch

    key = jax.random.PRNGKey(0)
    keys = jax.random.split(key, 10)

    # Node features; zero-padded to HID lanes for the kernel (exact).
    x = jax.random.normal(keys[0], (G_BATCHES, N_NODES, F_IN), jnp.float32)
    x_pad = jnp.zeros((G_BATCHES, N_NODES, HID), jnp.float32).at[:, :, :F_IN].set(x)

    batch = jnp.repeat(jnp.arange(B_GRAPHS), NODES_PER)
    pool = build_mean_pool(batch, N_NODES, B_GRAPHS)            # (B, N)

    # Deterministic edges: per-graph undirected ring + a per-batch chord (skip=2+g).
    a_list = []
    for g in range(G_BATCHES):
        src, dst = [], []
        skip = 2 + g
        for gr in range(B_GRAPHS):
            base = gr * NODES_PER
            for i in range(NODES_PER):
                u = base + i
                v = base + (i + 1) % NODES_PER
                w = base + (i + skip) % NODES_PER
                src += [u, v, u, w]
                dst += [v, u, w, u]
        edge_index = jnp.array([src, dst], dtype=jnp.int32)
        a_list.append(build_norm_adj(edge_index, N_NODES))
    a_hat = jnp.stack(a_list)                                   # (G, N, N) f32

    # Mean-pool hoisted through layer 2: pool_a = pool @ A_hat, computed once in f32.
    pool_a = jnp.einsum('bn,gnm->gbm', pool, a_hat)             # (G, B, N)

    def lin_init(k, fan_in, fan_out):
        bound = 1.0 / jnp.sqrt(fan_in)
        kw, kb = jax.random.split(k)
        w = jax.random.uniform(kw, (fan_in, fan_out), jnp.float32, -bound, bound)
        b = jax.random.uniform(kb, (1, fan_out), jnp.float32, -bound, bound)
        return w, b

    # GCN layer weights + non-trivial GraphNorm params (weight/bias/mean_scale).
    w0, b0 = lin_init(keys[1], F_IN, HID)
    w1, b1 = lin_init(keys[2], HID, HID)
    w2, b2 = lin_init(keys[3], HID, HID)
    g0 = 1.0 + 0.1 * jax.random.normal(keys[6], (1, HID))
    be0 = 0.05 * jax.random.normal(keys[7], (1, HID))
    al0 = jnp.full((1, HID), 0.9, jnp.float32)
    g1 = 1.0 + 0.1 * jax.random.normal(keys[8], (1, HID))
    be1 = 0.05 * jax.random.normal(keys[9], (1, HID))
    al1 = jnp.full((1, HID), 0.8, jnp.float32)

    # Head: Linear(HID, NHID) -> ReLU -> Linear(NHID, NOUT).
    wh1, bh1 = lin_init(keys[4], HID, NHID)
    wh2, bh2 = lin_init(keys[5], NHID, NOUT)

    # Lane-dense padding (zero rows/cols -> exact after slicing back).
    w0_pad = jnp.zeros((HID, HID), jnp.float32).at[:F_IN, :].set(w0)
    wh2_pad = jnp.zeros((NHID, HID), jnp.float32).at[:, :NOUT].set(wh2)
    bh2_pad = jnp.zeros((1, HID), jnp.float32).at[:, :NOUT].set(bh2)

    # Pack operands: a handful of DMAs instead of a dozen tiny padded buffers.
    bf = jnp.bfloat16
    w_gnn = jnp.stack([w0_pad, w1, w2]).astype(bf)              # (3, HID, HID)
    p_gnn = jnp.concatenate(
        [b0, g0, be0, al0, b1, g1, be1, al1, b2], axis=0)       # (9, HID) f32
    w_head = jnp.stack([wh1, wh2_pad]).astype(bf)               # (2, HID, HID)
    p_head = jnp.concatenate([bh1, bh2_pad], axis=0)            # (2, HID) f32

    out = graph_encoder_forward(
        a_hat.astype(bf), x_pad.astype(bf), pool_a.astype(bf),
        w_gnn, p_gnn, w_head, p_head, NOUT)
    out = jax.block_until_ready(out)
    assert out.shape == (G_BATCHES * B_GRAPHS, NOUT)

    # Mirror reference: identical math/dtype path as the kernels, executed by XLA.
    pooled_ref = jnp.stack([
        _gnn_batch_math(a_hat[g].astype(bf), x_pad[g].astype(bf), pool_a[g].astype(bf),
                        w_gnn[0], w_gnn[1], w_gnn[2],
                        b0, g0, be0, al0, b1, g1, be1, al1, b2)
        for g in range(G_BATCHES)])
    ref_mirror = _head_math(pooled_ref.reshape(G_BATCHES * B_GRAPHS, HID),
                            w_head[0], w_head[1], bh1, bh2_pad)[:, :NOUT]

    # Full-f32 reference (original unfused order, unpadded weights).
    params = (w0, b0, g0, be0, al0, w1, b1, g1, be1, al1, w2, b2,
              wh1, bh1, wh2, bh2)
    ref_f32 = jnp.concatenate([
        reference_forward_f32(a_hat[g], x[g], pool, params) for g in range(G_BATCHES)])

    # Tight check vs. the bf16-matched mirror; loose check vs. full-f32 math
    # (bf16 operands through 3 stacked propagations -> ~1% relative error expected).
    assert jnp.allclose(out, ref_mirror, atol=2e-2, rtol=2e-2)
    assert jnp.allclose(out, ref_f32, atol=1e-1, rtol=1e-1)

    print("KERNEL_OK")
</pallas_src>

<mosaic_0001>
module attributes {stable_mosaic.version = 11 : i64} {
  func.func @gnn_kernel(%arg0: i32, %arg1: memref<1x256x256xbf16, #tpu.memory_space<vmem>>, %arg2: memref<1x256x128xbf16, #tpu.memory_space<vmem>>, %arg3: memref<1x8x256xbf16, #tpu.memory_space<vmem>>, %arg4: memref<3x128x128xbf16, #tpu.memory_space<vmem>>, %arg5: memref<9x128xf32, #tpu.memory_space<vmem>>, %arg6: memref<1x8x128xf32, #tpu.memory_space<vmem>>) attributes {dimension_semantics = [#tpu.dimension_semantics<parallel>], iteration_bounds = array<i64: 4>, scalar_prefetch = 0 : i64, scratch_operands = 0 : i64, tpu.core_type = #tpu.core_type<tc>, window_params = [{transform_indices = @transform_0, window_bounds = array<i64: 1, 256, 256>}, {transform_indices = @transform_1, window_bounds = array<i64: 1, 256, 128>}, {transform_indices = @transform_2, window_bounds = array<i64: 1, 8, 256>}, {pipeline_mode = #tpu.pipeline_mode<synchronous>, transform_indices = @transform_3, window_bounds = array<i64: 3, 128, 128>}, {pipeline_mode = #tpu.pipeline_mode<synchronous>, transform_indices = @transform_4, window_bounds = array<i64: 9, 128>}, {transform_indices = @transform_5, window_bounds = array<i64: 1, 8, 128>}]} {
    %c0 = arith.constant 0 : index
    %c0_0 = arith.constant 0 : index
    %0 = vector.load %arg5[%c0, %c0_0] : memref<9x128xf32, #tpu.memory_space<vmem>>, vector<9x128xf32>
    %c0_1 = arith.constant 0 : index
    %c0_2 = arith.constant 0 : index
    %c0_3 = arith.constant 0 : index
    %1 = vector.load %arg1[%c0_1, %c0_2, %c0_3] : memref<1x256x256xbf16, #tpu.memory_space<vmem>>, vector<1x256x256xbf16>
    %2 = vector.shape_cast %1 : vector<1x256x256xbf16> to vector<256x256xbf16>
    %c0_4 = arith.constant 0 : index
    %c0_5 = arith.constant 0 : index
    %c0_6 = arith.constant 0 : index
    %3 = vector.load %arg2[%c0_4, %c0_5, %c0_6] : memref<1x256x128xbf16, #tpu.memory_space<vmem>>, vector<1x256x128xbf16>
    %4 = vector.shape_cast %3 : vector<1x256x128xbf16> to vector<256x128xbf16>
    %c0_7 = arith.constant 0 : index
    %c0_8 = arith.constant 0 : index
    %c0_9 = arith.constant 0 : index
    %5 = vector.load %arg3[%c0_7, %c0_8, %c0_9] : memref<1x8x256xbf16, #tpu.memory_space<vmem>>, vector<1x8x256xbf16>
    %6 = vector.shape_cast %5 : vector<1x8x256xbf16> to vector<8x256xbf16>
    %c0_10 = arith.constant 0 : index
    %c0_11 = arith.constant 0 : index
    %c0_12 = arith.constant 0 : index
    %7 = vector.load %arg4[%c0_10, %c0_11, %c0_12] : memref<3x128x128xbf16, #tpu.memory_space<vmem>>, vector<1x128x128xbf16>
    %8 = vector.shape_cast %7 : vector<1x128x128xbf16> to vector<128x128xbf16>
    %c1 = arith.constant 1 : index
    %c0_13 = arith.constant 0 : index
    %c0_14 = arith.constant 0 : index
    %9 = vector.load %arg4[%c1, %c0_13, %c0_14] : memref<3x128x128xbf16, #tpu.memory_space<vmem>>, vector<1x128x128xbf16>
    %10 = vector.shape_cast %9 : vector<1x128x128xbf16> to vector<128x128xbf16>
    %c2 = arith.constant 2 : index
    %c0_15 = arith.constant 0 : index
    %c0_16 = arith.constant 0 : index
    %11 = vector.load %arg4[%c2, %c0_15, %c0_16] : memref<3x128x128xbf16, #tpu.memory_space<vmem>>, vector<1x128x128xbf16>
    %12 = vector.shape_cast %11 : vector<1x128x128xbf16> to vector<128x128xbf16>
    %13 = vector.extract_strided_slice %0 {offsets = [0, 0], sizes = [1, 128], strides = [1, 1]} : vector<9x128xf32> to vector<1x128xf32>
    %14 = vector.extract_strided_slice %0 {offsets = [1, 0], sizes = [1, 128], strides = [1, 1]} : vector<9x128xf32> to vector<1x128xf32>
    %15 = vector.extract_strided_slice %0 {offsets = [2, 0], sizes = [1, 128], strides = [1, 1]} : vector<9x128xf32> to vector<1x128xf32>
    %16 = vector.extract_strided_slice %0 {offsets = [3, 0], sizes = [1, 128], strides = [1, 1]} : vector<9x128xf32> to vector<1x128xf32>
    %17 = vector.extract_strided_slice %0 {offsets = [4, 0], sizes = [1, 128], strides = [1, 1]} : vector<9x128xf32> to vector<1x128xf32>
    %18 = vector.extract_strided_slice %0 {offsets = [5, 0], sizes = [1, 128], strides = [1, 1]} : vector<9x128xf32> to vector<1x128xf32>
    %19 = vector.extract_strided_slice %0 {offsets = [6, 0], sizes = [1, 128], strides = [1, 1]} : vector<9x128xf32> to vector<1x128xf32>
    %20 = vector.extract_strided_slice %0 {offsets = [7, 0], sizes = [1, 128], strides = [1, 1]} : vector<9x128xf32> to vector<1x128xf32>
    %21 = vector.extract_strided_slice %0 {offsets = [8, 0], sizes = [1, 128], strides = [1, 1]} : vector<9x128xf32> to vector<1x128xf32>
    %cst = arith.constant 1.000000e+00 : bf16
    %22 = vector.broadcast %cst : bf16 to vector<8x256xbf16>
    %cst_17 = arith.constant dense<0.000000e+00> : vector<256x128xf32>
    %23 = tpu.matmul %2, %4, %cst_17 {dimension_numbers = #tpu.dot_dimension_numbers<[1], [0], [0], [1], [0, 0, 1, 1], [], []>} : vector<256x256xbf16>, vector<256x128xbf16>, vector<256x128xf32> -> vector<256x128xf32>
    %24 = arith.truncf %23 : vector<256x128xf32> to vector<256x128xbf16>
    %cst_18 = arith.constant dense<0.000000e+00> : vector<256x128xf32>
    %25 = tpu.matmul %24, %8, %cst_18 {dimension_numbers = #tpu.dot_dimension_numbers<[1], [0], [0], [1], [0, 0, 1, 1], [], []>} : vector<256x128xbf16>, vector<128x128xbf16>, vector<256x128xf32> -> vector<256x128xf32>
    %26 = vector.broadcast %13 : vector<1x128xf32> to vector<256x128xf32>
    %27 = arith.addf %25, %26 : vector<256x128xf32>
    %28 = arith.truncf %27 : vector<256x128xf32> to vector<256x128xbf16>
    %cst_19 = arith.constant dense<0.000000e+00> : vector<8x128xf32>
    %29 = tpu.matmul %22, %28, %cst_19 {dimension_numbers = #tpu.dot_dimension_numbers<[1], [0], [0], [1], [0, 0, 1, 1], [], []>} : vector<8x256xbf16>, vector<256x128xbf16>, vector<8x128xf32> -> vector<8x128xf32>
    %30 = vector.extract_strided_slice %29 {offsets = [0, 0], sizes = [1, 128], strides = [1, 1]} : vector<8x128xf32> to vector<1x128xf32>
    %cst_20 = arith.constant 3.906250e-03 : f32
    %31 = vector.broadcast %cst_20 : f32 to vector<1x128xf32>
    %32 = arith.mulf %30, %31 : vector<1x128xf32>
    %33 = arith.mulf %27, %27 : vector<256x128xf32>
    %34 = arith.truncf %33 : vector<256x128xf32> to vector<256x128xbf16>
    %cst_21 = arith.constant dense<0.000000e+00> : vector<8x128xf32>
    %35 = tpu.matmul %22, %34, %cst_21 {dimension_numbers = #tpu.dot_dimension_numbers<[1], [0], [0], [1], [0, 0, 1, 1], [], []>} : vector<8x256xbf16>, vector<256x128xbf16>, vector<8x128xf32> -> vector<8x128xf32>
    %36 = vector.extract_strided_slice %35 {offsets = [0, 0], sizes = [1, 128], strides = [1, 1]} : vector<8x128xf32> to vector<1x128xf32>
    %cst_22 = arith.constant 3.906250e-03 : f32
    %37 = vector.broadcast %cst_22 : f32 to vector<1x128xf32>
    %38 = arith.mulf %36, %37 : vector<1x128xf32>
    %cst_23 = arith.constant 2.000000e+00 : f32
    %39 = vector.broadcast %cst_23 : f32 to vector<1x128xf32>
    %40 = arith.mulf %39, %16 : vector<1x128xf32>
    %41 = arith.mulf %16, %16 : vector<1x128xf32>
    %42 = arith.subf %40, %41 : vector<1x128xf32>
    %43 = arith.mulf %32, %32 : vector<1x128xf32>
    %44 = arith.mulf %42, %43 : vector<1x128xf32>
    %45 = arith.subf %38, %44 : vector<1x128xf32>
    %cst_24 = arith.constant 0.000000e+00 : f32
    %46 = vector.broadcast %cst_24 : f32 to vector<1x128xf32>
    %47 = arith.maximumf %45, %46 : vector<1x128xf32>
    %48 = arith.mulf %16, %32 : vector<1x128xf32>
    %49 = vector.broadcast %48 : vector<1x128xf32> to vector<256x128xf32>
    %50 = arith.subf %27, %49 : vector<256x128xf32>
    %51 = vector.broadcast %14 : vector<1x128xf32> to vector<256x128xf32>
    %52 = arith.mulf %51, %50 : vector<256x128xf32>
    %cst_25 = arith.constant 9.99999974E-6 : f32
    %53 = vector.broadcast %cst_25 : f32 to vector<1x128xf32>
    %54 = arith.addf %47, %53 : vector<1x128xf32>
    %55 = math.rsqrt %54 : vector<1x128xf32>
    %56 = vector.broadcast %55 : vector<1x128xf32> to vector<256x128xf32>
    %57 = arith.mulf %52, %56 : vector<256x128xf32>
    %58 = vector.broadcast %15 : vector<1x128xf32> to vector<256x128xf32>
    %59 = arith.addf %57, %58 : vector<256x128xf32>
    %cst_26 = arith.constant 0.000000e+00 : f32
    %60 = vector.broadcast %cst_26 : f32 to vector<256x128xf32>
    %61 = arith.maximumf %59, %60 : vector<256x128xf32>
    %62 = arith.truncf %61 : vector<256x128xf32> to vector<256x128xbf16>
    %cst_27 = arith.constant dense<0.000000e+00> : vector<256x128xf32>
    %63 = tpu.matmul %62, %10, %cst_27 {dimension_numbers = #tpu.dot_dimension_numbers<[1], [0], [0], [1], [0, 0, 1, 1], [], []>} : vector<256x128xbf16>, vector<128x128xbf16>, vector<256x128xf32> -> vector<256x128xf32>
    %64 = arith.truncf %63 : vector<256x128xf32> to vector<256x128xbf16>
    %cst_28 = arith.constant dense<0.000000e+00> : vector<256x128xf32>
    %65 = tpu.matmul %2, %64, %cst_28 {dimension_numbers = #tpu.dot_dimension_numbers<[1], [0], [0], [1], [0, 0, 1, 1], [], []>} : vector<256x256xbf16>, vector<256x128xbf16>, vector<256x128xf32> -> vector<256x128xf32>
    %66 = vector.broadcast %17 : vector<1x128xf32> to vector<256x128xf32>
    %67 = arith.addf %65, %66 : vector<256x128xf32>
    %68 = arith.truncf %67 : vector<256x128xf32> to vector<256x128xbf16>
    %cst_29 = arith.constant dense<0.000000e+00> : vector<8x128xf32>
    %69 = tpu.matmul %22, %68, %cst_29 {dimension_numbers = #tpu.dot_dimension_numbers<[1], [0], [0], [1], [0, 0, 1, 1], [], []>} : vector<8x256xbf16>, vector<256x128xbf16>, vector<8x128xf32> -> vector<8x128xf32>
    %70 = vector.extract_strided_slice %69 {offsets = [0, 0], sizes = [1, 128], strides = [1, 1]} : vector<8x128xf32> to vector<1x128xf32>
    %cst_30 = arith.constant 3.906250e-03 : f32
    %71 = vector.broadcast %cst_30 : f32 to vector<1x128xf32>
    %72 = arith.mulf %70, %71 : vector<1x128xf32>
    %73 = arith.mulf %67, %67 : vector<256x128xf32>
    %74 = arith.truncf %73 : vector<256x128xf32> to vector<256x128xbf16>
    %cst_31 = arith.constant dense<0.000000e+00> : vector<8x128xf32>
    %75 = tpu.matmul %22, %74, %cst_31 {dimension_numbers = #tpu.dot_dimension_numbers<[1], [0], [0], [1], [0, 0, 1, 1], [], []>} : vector<8x256xbf16>, vector<256x128xbf16>, vector<8x128xf32> -> vector<8x128xf32>
    %76 = vector.extract_strided_slice %75 {offsets = [0, 0], sizes = [1, 128], strides = [1, 1]} : vector<8x128xf32> to vector<1x128xf32>
    %cst_32 = arith.constant 3.906250e-03 : f32
    %77 = vector.broadcast %cst_32 : f32 to vector<1x128xf32>
    %78 = arith.mulf %76, %77 : vector<1x128xf32>
    %cst_33 = arith.constant 2.000000e+00 : f32
    %79 = vector.broadcast %cst_33 : f32 to vector<1x128xf32>
    %80 = arith.mulf %79, %20 : vector<1x128xf32>
    %81 = arith.mulf %20, %20 : vector<1x128xf32>
    %82 = arith.subf %80, %81 : vector<1x128xf32>
    %83 = arith.mulf %72, %72 : vector<1x128xf32>
    %84 = arith.mulf %82, %83 : vector<1x128xf32>
    %85 = arith.subf %78, %84 : vector<1x128xf32>
    %cst_34 = arith.constant 0.000000e+00 : f32
    %86 = vector.broadcast %cst_34 : f32 to vector<1x128xf32>
    %87 = arith.maximumf %85, %86 : vector<1x128xf32>
    %88 = arith.mulf %20, %72 : vector<1x128xf32>
    %89 = vector.broadcast %88 : vector<1x128xf32> to vector<256x128xf32>
    %90 = arith.subf %67, %89 : vector<256x128xf32>
    %91 = vector.broadcast %18 : vector<1x128xf32> to vector<256x128xf32>
    %92 = arith.mulf %91, %90 : vector<256x128xf32>
    %cst_35 = arith.constant 9.99999974E-6 : f32
    %93 = vector.broadcast %cst_35 : f32 to vector<1x128xf32>
    %94 = arith.addf %87, %93 : vector<1x128xf32>
    %95 = math.rsqrt %94 : vector<1x128xf32>
    %96 = vector.broadcast %95 : vector<1x128xf32> to vector<256x128xf32>
    %97 = arith.mulf %92, %96 : vector<256x128xf32>
    %98 = vector.broadcast %19 : vector<1x128xf32> to vector<256x128xf32>
    %99 = arith.addf %97, %98 : vector<256x128xf32>
    %cst_36 = arith.constant 0.000000e+00 : f32
    %100 = vector.broadcast %cst_36 : f32 to vector<256x128xf32>
    %101 = arith.maximumf %99, %100 : vector<256x128xf32>
    %102 = arith.truncf %101 : vector<256x128xf32> to vector<256x128xbf16>
    %cst_37 = arith.constant dense<0.000000e+00> : vector<8x128xf32>
    %103 = tpu.matmul %6, %102, %cst_37 {dimension_numbers = #tpu.dot_dimension_numbers<[1], [0], [0], [1], [0, 0, 1, 1], [], []>} : vector<8x256xbf16>, vector<256x128xbf16>, vector<8x128xf32> -> vector<8x128xf32>
    %104 = arith.truncf %103 : vector<8x128xf32> to vector<8x128xbf16>
    %cst_38 = arith.constant dense<0.000000e+00> : vector<8x128xf32>
    %105 = tpu.matmul %104, %12, %cst_38 {dimension_numbers = #tpu.dot_dimension_numbers<[1], [0], [0], [1], [0, 0, 1, 1], [], []>} : vector<8x128xbf16>, vector<128x128xbf16>, vector<8x128xf32> -> vector<8x128xf32>
    %106 = vector.broadcast %21 : vector<1x128xf32> to vector<8x128xf32>
    %107 = arith.addf %105, %106 : vector<8x128xf32>
    %c0_39 = arith.constant 0 : index
    %c0_40 = arith.constant 0 : index
    %c0_41 = arith.constant 0 : index
    %108 = vector.load %arg6[%c0_39, %c0_40, %c0_41] : memref<1x8x128xf32, #tpu.memory_space<vmem>>, vector<1x8x128xf32>
    %109 = vector.shape_cast %108 : vector<1x8x128xf32> to vector<8x128xf32>
    %110 = vector.shape_cast %107 : vector<8x128xf32> to vector<1x8x128xf32>
    tpu.vector_store %arg6[%c0_39, %c0_40, %c0_41], %110 {strides = array<i32>} : memref<1x8x128xf32, #tpu.memory_space<vmem>>, vector<1x8x128xf32>,
    return
  }
  func.func @transform_0(%arg0: i32) -> (i32, i32, i32) {
    %c0_i32 = arith.constant 0 : i32
    %c0_i32_0 = arith.constant 0 : i32
    %c0_i32_1 = arith.constant 0 : i32
    return %arg0, %c0_i32, %c0_i32_0 : i32, i32, i32
  }
  func.func @transform_1(%arg0: i32) -> (i32, i32, i32) {
    %c0_i32 = arith.constant 0 : i32
    %c0_i32_0 = arith.constant 0 : i32
    %c0_i32_1 = arith.constant 0 : i32
    return %arg0, %c0_i32, %c0_i32_0 : i32, i32, i32
  }
  func.func @transform_2(%arg0: i32) -> (i32, i32, i32) {
    %c0_i32 = arith.constant 0 : i32
    %c0_i32_0 = arith.constant 0 : i32
    %c0_i32_1 = arith.constant 0 : i32
    return %arg0, %c0_i32, %c0_i32_0 : i32, i32, i32
  }
  func.func @transform_3(%arg0: i32) -> (i32, i32, i32) {
    %c0_i32 = arith.constant 0 : i32
    %c0_i32_0 = arith.constant 0 : i32
    %c0_i32_1 = arith.constant 0 : i32
    %c0_i32_2 = arith.constant 0 : i32
    return %c0_i32, %c0_i32_0, %c0_i32_1 : i32, i32, i32
  }
  func.func @transform_4(%arg0: i32) -> (i32, i32) {
    %c0_i32 = arith.constant 0 : i32
    %c0_i32_0 = arith.constant 0 : i32
    %c0_i32_1 = arith.constant 0 : i32
    return %c0_i32, %c0_i32_0 : i32, i32
  }
  func.func @transform_5(%arg0: i32) -> (i32, i32, i32) {
    %c0_i32 = arith.constant 0 : i32
    %c0_i32_0 = arith.constant 0 : i32
    %c0_i32_1 = arith.constant 0 : i32
    return %arg0, %c0_i32, %c0_i32_0 : i32, i32, i32
  }
}

</mosaic_0001>

<llo_original>
// kernel: tpu_custom_call.1
$region0: #{tpu_custom_call.1}
  #allocation0 [shape = 'u32[]', space=smem, size = 0x4, offset = 0x4, fixed_abs, tag = 'smem constant byte address 0x4 - core index']
  #allocation1 [shape = 'u32[144,128]{1,0:T(1,128)}', space=vmem, size = 0x12000, scoped, tag = 'internal scratch']
  %s0 = inlined_call_operand.hbm [shape: bf16[4,256,256], index: 0, kind: input, shape index: {}]
  %s1 = inlined_call_operand.hbm [shape: bf16[4,256,128], index: 1, kind: input, shape index: {}]
  %s2 = inlined_call_operand.hbm [shape: bf16[4,8,256], index: 2, kind: input, shape index: {}]
  %s3 = inlined_call_operand.hbm [shape: bf16[3,128,128], index: 3, kind: input, shape index: {}]
  %s4 = inlined_call_operand.hbm [shape: f32[9,128], index: 4, kind: input, shape index: {}]
  %s5 = inlined_call_operand.hbm [shape: f32[4,8,128], index: 5, kind: output, shape index: {}]
  %s6 = sld [smem:[#allocation0]]
  $region73: #{tpu_custom_call.1} parent=0
    _
  %s8 = ssub.s32 1, %s6
  %s9 = scalar_select 0, %s8, %s6
  $region1: #{tpu_custom_call.1} parent=0
    #allocation2 [shape = 'u8[262144]{0}', space=vmem, size = 0x40000, scoped, tag = 'input window, operand 0']
    #allocation3 [shape = 's32[2]{0}', space=sflag, size = 0x8, scoped, tag = 'scoped memory for tpu_custom_call.1']
    #allocation4 [shape = 's32[2]{0}', space=sflag, size = 0x8, scoped, tag = 'scoped memory for tpu_custom_call.1']
    #allocation5 [shape = 'u8[131072]{0}', space=vmem, size = 0x20000, scoped, tag = 'input window, operand 1']
    #allocation6 [shape = 's32[2]{0}', space=sflag, size = 0x8, scoped, tag = 'scoped memory for tpu_custom_call.1']
    #allocation7 [shape = 'u8[8192]{0}', space=vmem, size = 0x2000, scoped, tag = 'input window, operand 2']
    #allocation8 [shape = 'u8[98304]{0}', space=vmem, size = 0x18000, scoped, tag = 'input window, operand 3, single buffered']
    #allocation9 [shape = 's32[1]{0}', space=sflag, size = 0x4, scoped, tag = 'scoped memory for tpu_custom_call.1']
    #allocation10 [shape = 'u8[8192]{0}', space=vmem, size = 0x2000, scoped, tag = 'input window, operand 4, single buffered']
    #allocation11 [shape = 'u8[8192]{0}', space=vmem, size = 0x2000, scoped, tag = 'output window, operand 0']
    %10 = vsyncpa [#allocation3], 0
    %s11 = scalar_lea.sflag [#allocation3], 1
    %12 = vsyncpa %s11, 0
    %13 = vsyncpa [#allocation6], 0
    %s14 = scalar_lea.sflag [#allocation6], 1
    %15 = vsyncpa %s14, 0
    %16 = vsyncpa [#allocation9], 0
    %17 = vsyncpa [#allocation4], 0
    %s18 = scalar_lea.sflag [#allocation4], 1
    %19 = vsyncpa %s18, 0
    loop: start=0, step=1, limit=6
    $region2: #{tpu_custom_call.1} parent=1 // loop_pre_header
      _
    $region3: #{tpu_custom_call.1} parent=1 // loop_header
      %s21 = sphi 0, %s25
      %p22 = scmp.ge.s32.totalorder %s21, 6
      %s31 = sphi 0, %s33
      %s34 = sphi 0, %s31
      %s35 = sphi 0, %s34
      %s51 = sphi 0, %s35
      %s57 = sphi 0, %s59
      %s60 = sphi 0, %s57
      %s61 = sphi 0, %s60
      %s77 = sphi 0, %s61
      %s83 = sphi 0, %s85
      %s86 = sphi 0, %s83
      %s87 = sphi 0, %s86
      %s103 = sphi 0, %s87
      %s107 = sphi 0, %s107
      %s109 = sphi 0, %s107
      %s110 = sphi 0, %s109
      %s124 = sphi 0, %s110
      %s128 = sphi 0, %s128
      %s130 = sphi 0, %s128
      %s131 = sphi 0, %s130
      %s145 = sphi 0, %s131
      %s151 = sphi 0, %s153
      %s154 = sphi 0, %s151
      %s155 = sphi 0, %s154
      %s171 = sphi 0, %s155
    $region4: #{tpu_custom_call.1} parent=1 // loop_header_branch
      %24 = sbr.rel (%p22) target = $region8
    $region5: #{tpu_custom_call.1} parent=1 // loop_body
      %s26 = ssub.s32 %s21, 1
      %s27 = ssub.s32 %s21, 2
      %s28 = sadd.s32 %s21, 1
      %s29 = ssub.s32 %s21, %s28
      %p30 = scmp.eq.s32.totalorder %s29, 0
      %s32 = sadd.s32 %s31, 1
      %s33 = scalar_select %p30, %s31, %s32
      %p36 = pneg %p30
      %p37 = scmp.eq.s32.totalorder %s21, 3
      %p38 = por %p36, %p37
      %p39 = scmp.ne.s32.totalorder %s31, %s34
      %p40 = scmp.eq.s32.totalorder %s21, 0
      %p41 = por %p39, %p40
      %p42 = scmp.ne.s32.totalorder %s31, %s34
      %p43 = scmp.eq.s32.totalorder %s26, 3
      %p44 = por %p42, %p43
      %p45 = scmp.ne.s32.totalorder %s34, %s35
      %p46 = scmp.eq.s32.totalorder %s26, 0
      %p47 = por %p45, %p46
      %p48 = scmp.ne.s32.totalorder %s34, %s35
      %p49 = scmp.eq.s32.totalorder %s27, 3
      %p50 = por %p48, %p49
      %p52 = scmp.ne.s32.totalorder %s35, %s51
      %p53 = scmp.eq.s32.totalorder %s27, 0
      %p54 = por %p52, %p53
      %s55 = ssub.s32 %s21, %s28
      %p56 = scmp.eq.s32.totalorder %s55, 0
      %s58 = sadd.s32 %s57, 1
      %s59 = scalar_select %p56, %s57, %s58
      %p62 = pneg %p56
      %p63 = scmp.eq.s32.totalorder %s21, 3
      %p64 = por %p62, %p63
      %p65 = scmp.ne.s32.totalorder %s57, %s60
      %p66 = scmp.eq.s32.totalorder %s21, 0
      %p67 = por %p65, %p66
      %p68 = scmp.ne.s32.totalorder %s57, %s60
      %p69 = scmp.eq.s32.totalorder %s26, 3
      %p70 = por %p68, %p69
      %p71 = scmp.ne.s32.totalorder %s60, %s61
      %p72 = scmp.eq.s32.totalorder %s26, 0
      %p73 = por %p71, %p72
      %p74 = scmp.ne.s32.totalorder %s60, %s61
      %p75 = scmp.eq.s32.totalorder %s27, 3
      %p76 = por %p74, %p75
      %p78 = scmp.ne.s32.totalorder %s61, %s77
      %p79 = scmp.eq.s32.totalorder %s27, 0
      %p80 = por %p78, %p79
      %s81 = ssub.s32 %s21, %s28
      %p82 = scmp.eq.s32.totalorder %s81, 0
      %s84 = sadd.s32 %s83, 1
      %s85 = scalar_select %p82, %s83, %s84
      %p88 = pneg %p82
      %p89 = scmp.eq.s32.totalorder %s21, 3
      %p90 = por %p88, %p89
      %p91 = scmp.ne.s32.totalorder %s83, %s86
      %p92 = scmp.eq.s32.totalorder %s21, 0
      %p93 = por %p91, %p92
      %p94 = scmp.ne.s32.totalorder %s83, %s86
      %p95 = scmp.eq.s32.totalorder %s26, 3
      %p96 = por %p94, %p95
      %p97 = scmp.ne.s32.totalorder %s86, %s87
      %p98 = scmp.eq.s32.totalorder %s26, 0
      %p99 = por %p97, %p98
      %p100 = scmp.ne.s32.totalorder %s86, %s87
      %p101 = scmp.eq.s32.totalorder %s27, 3
      %p102 = por %p100, %p101
      %p104 = scmp.ne.s32.totalorder %s87, %s103
      %p105 = scmp.eq.s32.totalorder %s27, 0
      %p106 = por %p104, %p105
      %s108 = sadd.s32 %s107, 1
      %p111 = scmp.eq.s32.totalorder %s21, 3
      %p112 = scmp.ne.s32.totalorder %s107, %s109
      %p113 = scmp.eq.s32.totalorder %s21, 0
      %p114 = por %p112, %p113
      %p115 = scmp.ne.s32.totalorder %s107, %s109
      %p116 = scmp.eq.s32.totalorder %s26, 3
      %p117 = por %p115, %p116
      %p118 = scmp.ne.s32.totalorder %s109, %s110
      %p119 = scmp.eq.s32.totalorder %s26, 0
      %p120 = por %p118, %p119
      %p121 = scmp.ne.s32.totalorder %s109, %s110
      %p122 = scmp.eq.s32.totalorder %s27, 3
      %p123 = por %p121, %p122
      %p125 = scmp.ne.s32.totalorder %s110, %s124
      %p126 = scmp.eq.s32.totalorder %s27, 0
      %p127 = por %p125, %p126
      %s129 = sadd.s32 %s128, 1
      %p132 = scmp.eq.s32.totalorder %s21, 3
      %p133 = scmp.ne.s32.totalorder %s128, %s130
      %p134 = scmp.eq.s32.totalorder %s21, 0
      %p135 = por %p133, %p134
      %p136 = scmp.ne.s32.totalorder %s128, %s130
      %p137 = scmp.eq.s32.totalorder %s26, 3
      %p138 = por %p136, %p137
      %p139 = scmp.ne.s32.totalorder %s130, %s131
      %p140 = scmp.eq.s32.totalorder %s26, 0
      %p141 = por %p139, %p140
      %p142 = scmp.ne.s32.totalorder %s130, %s131
      %p143 = scmp.eq.s32.totalorder %s27, 3
      %p144 = por %p142, %p143
      %p146 = scmp.ne.s32.totalorder %s131, %s145
      %p147 = scmp.eq.s32.totalorder %s27, 0
      %p148 = por %p146, %p147
      %s149 = ssub.s32 %s21, %s28
      %p150 = scmp.eq.s32.totalorder %s149, 0
      %s152 = sadd.s32 %s151, 1
      %s153 = scalar_select %p150, %s151, %s152
      %p156 = pneg %p150
      %p157 = scmp.eq.s32.totalorder %s21, 3
      %p158 = por %p156, %p157
      %p159 = scmp.ne.s32.totalorder %s151, %s154
      %p160 = scmp.eq.s32.totalorder %s21, 0
      %p161 = por %p159, %p160
      %p162 = scmp.ne.s32.totalorder %s151, %s154
      %p163 = scmp.eq.s32.totalorder %s26, 3
      %p164 = por %p162, %p163
      %p165 = scmp.ne.s32.totalorder %s154, %s155
      %p166 = scmp.eq.s32.totalorder %s26, 0
      %p167 = por %p165, %p166
      %p168 = scmp.ne.s32.totalorder %s154, %s155
      %p169 = scmp.eq.s32.totalorder %s27, 3
      %p170 = por %p168, %p169
      %p172 = scmp.ne.s32.totalorder %s155, %s171
      %p173 = scmp.eq.s32.totalorder %s27, 0
      %p174 = por %p172, %p173
      %p175 = scmp.le.s32.totalorder 1, %s21
      %p176 = scmp.lt.s32.totalorder %s21, 5
      %p177 = pnand %p175, %p176
      %p178 = pneg %p177
      // Predicated region
      $region9: #{tpu_custom_call.1} parent=5 // pred_check
        _
      $region10: #{tpu_custom_call.1} parent=5 // pred_check_branch
        %180 = sbr.rel (%p177) target = $region12
      $region11: #{tpu_custom_call.1} parent=5 // pred_region
        %s181 = ssub.s32 %s21, 1
        // Predicated region
        $region13: #{tpu_custom_call.1} parent=11 // pred_check
          %p182 = pneg %p120
        $region14: #{tpu_custom_call.1} parent=11 // pred_check_branch
          %184 = sbr.rel (%p182) target = $region16
        $region15: #{tpu_custom_call.1} parent=11 // pred_region
          %s186 = ssub.s32 3072, 3072
          %187 = vsyncadd [#allocation9], %s186
          %s188 = sshll.u32 [#allocation8], 4
          %s189 = int_to_ptr.vmem [resolvable:$true] %s188
          %194 = dma.hbm_to_vmem [thread:$0]  %s3, 3072, %s189, [#allocation9], 64, 64, 4
        $region16: #{tpu_custom_call.1} parent=11 // pred_fallthru
          _
        // Predicated region
        $region17: #{tpu_custom_call.1} parent=11 // pred_check
          %p195 = pneg %p141
        $region18: #{tpu_custom_call.1} parent=11 // pred_check_branch
          %197 = sbr.rel (%p195) target = $region20
        $region19: #{tpu_custom_call.1} parent=11 // pred_region
          %s199 = ssub.s32 256, 256
          %200 = vsyncadd [#allocation9], %s199
          %s201 = sshll.u32 [#allocation10], 4
          %s202 = int_to_ptr.vmem [resolvable:$true] %s201
          %207 = dma.hbm_to_vmem [thread:$0]  %s4, 256, %s202, [#allocation9], 128, 128, 8
        $region20: #{tpu_custom_call.1} parent=11 // pred_fallthru
          _
      $region12: #{tpu_custom_call.1} parent=5 // pred_fallthru
        _
      %p208 = scmp.lt.s32.totalorder %s21, 4
      // Predicated region
      $region21: #{tpu_custom_call.1} parent=5 // pred_check
        %p209 = pneg %p208
      $region22: #{tpu_custom_call.1} parent=5 // pred_check_branch
        %211 = sbr.rel (%p209) target = $region24
      $region23: #{tpu_custom_call.1} parent=5 // pred_region
        // Predicated region
        $region25: #{tpu_custom_call.1} parent=23 // pred_check
          %p212 = pneg %p41
        $region26: #{tpu_custom_call.1} parent=23 // pred_check_branch
          %214 = sbr.rel (%p212) target = $region28
        $region27: #{tpu_custom_call.1} parent=23 // pred_region
          %s215 = sand.u32 %s31, 1
          %s216 = scalar_lea.sflag [#allocation3], %s215
          %s217 = sand.u32 %s31, 1
          %s218 = smul.addr %s217, 256
          %s219 = scalar_lea.vmem [#allocation2], %s218
          %s221 = ssub.s32 4096, 4096
          %222 = vsyncadd %s216, %s221
          %s223 = smul.addr %s21, 64
          %s224 = smul.addr %s223, 64
          %s225 = scalar_lea.hbm %s0, %s224
          %s226 = sshll.u32 %s219, 4
          %s227 = int_to_ptr.vmem [resolvable:$true] %s226
          %232 = dma.hbm_to_vmem [thread:$0]  %s225, 4096, %s227, %s216, 128, 128, 8
        $region28: #{tpu_custom_call.1} parent=23 // pred_fallthru
          _
        // Predicated region
        $region29: #{tpu_custom_call.1} parent=23 // pred_check
          %p233 = pneg %p67
        $region30: #{tpu_custom_call.1} parent=23 // pred_check_branch
          %235 = sbr.rel (%p233) target = $region32
        $region31: #{tpu_custom_call.1} parent=23 // pred_region
          %s236 = sand.u32 %s21, 1
          %s237 = scalar_lea.sflag [#allocation6], %s236
          %s238 = sand.u32 %s57, 1
          %s239 = smul.addr %s238, 128
          %s240 = scalar_lea.vmem [#allocation5], %s239
          %s242 = ssub.s32 2048, 2048
          %243 = vsyncadd %s237, %s242
          %s244 = smul.addr %s21, 32
          %s245 = smul.addr %s244, 64
          %s246 = scalar_lea.hbm %s1, %s245
          %s247 = sshll.u32 %s240, 4
          %s248 = int_to_ptr.vmem [resolvable:$true] %s247
          %253 = dma.hbm_to_vmem [thread:$0]  %s246, 2048, %s248, %s237, 64, 64, 4
        $region32: #{tpu_custom_call.1} parent=23 // pred_fallthru
          _
        // Predicated region
        $region33: #{tpu_custom_call.1} parent=23 // pred_check
          %p254 = pneg %p93
        $region34: #{tpu_custom_call.1} parent=23 // pred_check_branch
          %256 = sbr.rel (%p254) target = $region36
        $region35: #{tpu_custom_call.1} parent=23 // pred_region
          %s257 = sand.u32 %s21, 1
          %s258 = scalar_lea.sflag [#allocation6], %s257
          %s259 = sand.u32 %s83, 1
          %s260 = smul.addr %s259, 8
          %s261 = scalar_lea.vmem [#allocation7], %s260
          %s263 = ssub.s32 128, 128
          %264 = vsyncadd %s258, %s263
          %s265 = smul.addr %s21, 2
          %s266 = smul.addr %s265, 64
          %s267 = scalar_lea.hbm %s2, %s266
          %s269 = sshll.u32 %s261, 4
          %s270 = int_to_ptr.vmem [resolvable:$true] %s269
          %272 = dma.hbm_to_vmem [thread:$0]  %s267, 128, %s270, %s258
        $region36: #{tpu_custom_call.1} parent=23 // pred_fallthru
          _
      $region24: #{tpu_custom_call.1} parent=5 // pred_fallthru
        _
      %p273 = scmp.le.s32.totalorder 1, %s21
      %p274 = scmp.lt.s32.totalorder %s21, 5
      %p275 = pnand %p273, %p274
      %p276 = pneg %p275
      // Predicated region
      $region37: #{tpu_custom_call.1} parent=5 // pred_check
        _
      $region38: #{tpu_custom_call.1} parent=5 // pred_check_branch
        %278 = sbr.rel (%p275) target = $region40
      $region39: #{tpu_custom_call.1} parent=5 // pred_region
        %s279 = ssub.s32 %s21, 1
        %s280 = sand.u32 %s34, 1
        %s281 = scalar_lea.sflag [#allocation3], %s280
        %s282 = sand.u32 %s34, 1
        %s283 = smul.addr %s282, 256
        %s284 = scalar_lea.vmem [#allocation2], %s283
        // Predicated region
        $region41: #{tpu_custom_call.1} parent=39 // pred_check
          %p285 = pneg %p47
        $region42: #{tpu_custom_call.1} parent=39 // pred_check_branch
          %287 = sbr.rel (%p285) target = $region44
        $region43: #{tpu_custom_call.1} parent=39 // pred_region
          %288 = dma.done %s281, 4096
        $region44: #{tpu_custom_call.1} parent=39 // pred_fallthru
          _
        %s289 = sand.u32 %s26, 1
        %s290 = scalar_lea.sflag [#allocation6], %s289
        %s291 = sand.u32 %s60, 1
        %s292 = smul.addr %s291, 128
        %s293 = scalar_lea.vmem [#allocation5], %s292
        // Predicated region
        $region45: #{tpu_custom_call.1} parent=39 // pred_check
          %p294 = pneg %p73
        $region46: #{tpu_custom_call.1} parent=39 // pred_check_branch
          %296 = sbr.rel (%p294) target = $region48
        $region47: #{tpu_custom_call.1} parent=39 // pred_region
          %297 = dma.done %s290, 2048
        $region48: #{tpu_custom_call.1} parent=39 // pred_fallthru
          _
        %s298 = sand.u32 %s26, 1
        %s299 = scalar_lea.sflag [#allocation6], %s298
        %s300 = sand.u32 %s86, 1
        %s301 = smul.addr %s300, 8
        %s302 = scalar_lea.vmem [#allocation7], %s301
        // Predicated region
        $region49: #{tpu_custom_call.1} parent=39 // pred_check
          %p303 = pneg %p99
        $region50: #{tpu_custom_call.1} parent=39 // pred_check_branch
          %305 = sbr.rel (%p303) target = $region52
        $region51: #{tpu_custom_call.1} parent=39 // pred_region
          %306 = dma.done %s299, 128
        $region52: #{tpu_custom_call.1} parent=39 // pred_fallthru
          _
        // Predicated region
        $region53: #{tpu_custom_call.1} parent=39 // pred_check
          %p307 = pneg %p120
        $region54: #{tpu_custom_call.1} parent=39 // pred_check_branch
          %309 = sbr.rel (%p307) target = $region56
        $region55: #{tpu_custom_call.1} parent=39 // pred_region
          %310 = dma.done [#allocation9], 3072
        $region56: #{tpu_custom_call.1} parent=39 // pred_fallthru
          _
        // Predicated region
        $region57: #{tpu_custom_call.1} parent=39 // pred_check
          %p311 = pneg %p141
        $region58: #{tpu_custom_call.1} parent=39 // pred_check_branch
          %313 = sbr.rel (%p311) target = $region60
        $region59: #{tpu_custom_call.1} parent=39 // pred_region
          %314 = dma.done [#allocation9], 256
        $region60: #{tpu_custom_call.1} parent=39 // pred_fallthru
          _
        %s315 = sand.u32 %s34, 1
        %s316 = scalar_lea.sflag [#allocation3], %s315
        %s317 = sand.u32 %s34, 1
        %s318 = smul.addr %s317, 256
        %s319 = scalar_lea.vmem [#allocation2], %s318
        %p320 = pneg %p47
        %p321 = pneg %p44
        %s322 = sand.u32 %s26, 1
        %s323 = scalar_lea.sflag [#allocation6], %s322
        %s324 = sand.u32 %s60, 1
        %s325 = smul.addr %s324, 128
        %s326 = scalar_lea.vmem [#allocation5], %s325
        %p327 = pneg %p73
        %p328 = pneg %p70
        %s329 = sand.u32 %s26, 1
        %s330 = scalar_lea.sflag [#allocation6], %s329
        %s331 = sand.u32 %s86, 1
        %s332 = smul.addr %s331, 8
        %s333 = scalar_lea.vmem [#allocation7], %s332
        %p334 = pneg %p99
        %p335 = pneg %p96
        %p336 = pneg %p120
        %p337 = pneg %p117
        %p338 = pneg %p141
        %p339 = pneg %p138
        %p340 = pneg %p167
        %p341 = pneg %p164
        %s342 = sand.u32 %s154, 1
        %s343 = scalar_lea.sflag [#allocation4], %s342
        %s344 = sand.u32 %s154, 1
        %s345 = smul.addr %s344, 8
        %s346 = scalar_lea.vmem [#allocation11], %s345
        %v349 = vld [vmem:[#allocation10] sm:$0xff]
        %v350 = vld [vmem:[#allocation10 + $0x8] sm:$0x1]
        %v351 = vld [vmem:[%s284] sm:$0xff]
        %v352 = vld [vmem:[%s284 + $0x8] sm:$0xff]
        %v353 = vld [vmem:[%s284 + $0x10] sm:$0xff]
        %v354 = vld [vmem:[%s284 + $0x18] sm:$0xff]
        %v355 = vld [vmem:[%s284 + $0x20] sm:$0xff]
        %v356 = vld [vmem:[%s284 + $0x28] sm:$0xff]
        %v357 = vld [vmem:[%s284 + $0x30] sm:$0xff]
        %v358 = vld [vmem:[%s284 + $0x38] sm:$0xff]
        %v359 = vld [vmem:[%s284 + $0x40] sm:$0xff]
        %v360 = vld [vmem:[%s284 + $0x48] sm:$0xff]
        %v361 = vld [vmem:[%s284 + $0x50] sm:$0xff]
        %v362 = vld [vmem:[%s284 + $0x58] sm:$0xff]
        %v363 = vld [vmem:[%s284 + $0x60] sm:$0xff]
        %v364 = vld [vmem:[%s284 + $0x68] sm:$0xff]
        %v365 = vld [vmem:[%s284 + $0x70] sm:$0xff]
        %v366 = vld [vmem:[%s284 + $0x78] sm:$0xff]
        %v367 = vld [vmem:[%s284 + $0x80] sm:$0xff]
        %v368 = vld [vmem:[%s284 + $0x88] sm:$0xff]
        %v369 = vld [vmem:[%s284 + $0x90] sm:$0xff]
        %v370 = vld [vmem:[%s284 + $0x98] sm:$0xff]
        %v371 = vld [vmem:[%s284 + $0xa0] sm:$0xff]
        %v372 = vld [vmem:[%s284 + $0xa8] sm:$0xff]
        %v373 = vld [vmem:[%s284 + $0xb0] sm:$0xff]
        %v374 = vld [vmem:[%s284 + $0xb8] sm:$0xff]
        %v375 = vld [vmem:[%s284 + $0xc0] sm:$0xff]
        %v376 = vld [vmem:[%s284 + $0xc8] sm:$0xff]
        %v377 = vld [vmem:[%s284 + $0xd0] sm:$0xff]
        %v378 = vld [vmem:[%s284 + $0xd8] sm:$0xff]
        %v379 = vld [vmem:[%s284 + $0xe0] sm:$0xff]
        %v380 = vld [vmem:[%s284 + $0xe8] sm:$0xff]
        %v381 = vld [vmem:[%s284 + $0xf0] sm:$0xff]
        %v382 = vld [vmem:[%s284 + $0xf8] sm:$0xff]
        %v383 = vld [vmem:[%s293] sm:$0xf]
        %v384 = vld [vmem:[%s293 + $0x4] sm:$0xf]
        %v385 = vld [vmem:[%s293 + $0x8] sm:$0xf]
        %v386 = vld [vmem:[%s293 + $0xc] sm:$0xf]
        %v387 = vld [vmem:[%s293 + $0x10] sm:$0xf]
        %v388 = vld [vmem:[%s293 + $0x14] sm:$0xf]
        %v389 = vld [vmem:[%s293 + $0x18] sm:$0xf]
        %v390 = vld [vmem:[%s293 + $0x1c] sm:$0xf]
        %v391 = vld [vmem:[%s293 + $0x20] sm:$0xf]
        %v392 = vld [vmem:[%s293 + $0x24] sm:$0xf]
        %v393 = vld [vmem:[%s293 + $0x28] sm:$0xf]
        %v394 = vld [vmem:[%s293 + $0x2c] sm:$0xf]
        %v395 = vld [vmem:[%s293 + $0x30] sm:$0xf]
        %v396 = vld [vmem:[%s293 + $0x34] sm:$0xf]
        %v397 = vld [vmem:[%s293 + $0x38] sm:$0xf]
        %v398 = vld [vmem:[%s293 + $0x3c] sm:$0xf]
        %v399 = vld [vmem:[%s293 + $0x40] sm:$0xf]
        %v400 = vld [vmem:[%s293 + $0x44] sm:$0xf]
        %v401 = vld [vmem:[%s293 + $0x48] sm:$0xf]
        %v402 = vld [vmem:[%s293 + $0x4c] sm:$0xf]
        %v403 = vld [vmem:[%s293 + $0x50] sm:$0xf]
        %v404 = vld [vmem:[%s293 + $0x54] sm:$0xf]
        %v405 = vld [vmem:[%s293 + $0x58] sm:$0xf]
        %v406 = vld [vmem:[%s293 + $0x5c] sm:$0xf]
        %v407 = vld [vmem:[%s293 + $0x60] sm:$0xf]
        %v408 = vld [vmem:[%s293 + $0x64] sm:$0xf]
        %v409 = vld [vmem:[%s293 + $0x68] sm:$0xf]
        %v410 = vld [vmem:[%s293 + $0x6c] sm:$0xf]
        %v411 = vld [vmem:[%s293 + $0x70] sm:$0xf]
        %v412 = vld [vmem:[%s293 + $0x74] sm:$0xf]
        %v413 = vld [vmem:[%s293 + $0x78] sm:$0xf]
        %v414 = vld [vmem:[%s293 + $0x7c] sm:$0xf]
        %v415 = vld [vmem:[%s302] sm:$0xff]
        %v416 = vld [vmem:[#allocation8] sm:$0xf]
        %v417 = vld [vmem:[#allocation8 + $0x4] sm:$0xf]
        %v418 = vld [vmem:[#allocation8 + $0x8] sm:$0xf]
        %v419 = vld [vmem:[#allocation8 + $0xc] sm:$0xf]
        %v420 = vld [vmem:[#allocation8 + $0x10] sm:$0xf]
        %v421 = vld [vmem:[#allocation8 + $0x14] sm:$0xf]
        %v422 = vld [vmem:[#allocation8 + $0x18] sm:$0xf]
        %v423 = vld [vmem:[#allocation8 + $0x1c] sm:$0xf]
        %v424 = vld [vmem:[#allocation8 + $0x20] sm:$0xf]
        %v425 = vld [vmem:[#allocation8 + $0x24] sm:$0xf]
        %v426 = vld [vmem:[#allocation8 + $0x28] sm:$0xf]
        %v427 = vld [vmem:[#allocation8 + $0x2c] sm:$0xf]
        %v428 = vld [vmem:[#allocation8 + $0x30] sm:$0xf]
        %v429 = vld [vmem:[#allocation8 + $0x34] sm:$0xf]
        %v430 = vld [vmem:[#allocation8 + $0x38] sm:$0xf]
        %v431 = vld [vmem:[#allocation8 + $0x3c] sm:$0xf]
        %s432 = scalar_lea.vmem [#allocation8], 64
        %v433 = vld [vmem:[%s432] sm:$0xf]
        %v434 = vld [vmem:[%s432 + $0x4] sm:$0xf]
        %v435 = vld [vmem:[%s432 + $0x8] sm:$0xf]
        %v436 = vld [vmem:[%s432 + $0xc] sm:$0xf]
        %v437 = vld [vmem:[%s432 + $0x10] sm:$0xf]
        %v438 = vld [vmem:[%s432 + $0x14] sm:$0xf]
        %v439 = vld [vmem:[%s432 + $0x18] sm:$0xf]
        %v440 = vld [vmem:[%s432 + $0x1c] sm:$0xf]
        %v441 = vld [vmem:[%s432 + $0x20] sm:$0xf]
        %v442 = vld [vmem:[%s432 + $0x24] sm:$0xf]
        %v443 = vld [vmem:[%s432 + $0x28] sm:$0xf]
        %v444 = vld [vmem:[%s432 + $0x2c] sm:$0xf]
        %v445 = vld [vmem:[%s432 + $0x30] sm:$0xf]
        %v446 = vld [vmem:[%s432 + $0x34] sm:$0xf]
        %v447 = vld [vmem:[%s432 + $0x38] sm:$0xf]
        %v448 = vld [vmem:[%s432 + $0x3c] sm:$0xf]
        %s449 = scalar_lea.vmem [#allocation8], 128
        %v450 = vld [vmem:[%s449] sm:$0xf]
        %v451 = vld [vmem:[%s449 + $0x4] sm:$0xf]
        %v452 = vld [vmem:[%s449 + $0x8] sm:$0xf]
        %v453 = vld [vmem:[%s449 + $0xc] sm:$0xf]
        %v454 = vld [vmem:[%s449 + $0x10] sm:$0xf]
        %v455 = vld [vmem:[%s449 + $0x14] sm:$0xf]
        %v456 = vld [vmem:[%s449 + $0x18] sm:$0xf]
        %v457 = vld [vmem:[%s449 + $0x1c] sm:$0xf]
        %v458 = vld [vmem:[%s449 + $0x20] sm:$0xf]
        %v459 = vld [vmem:[%s449 + $0x24] sm:$0xf]
        %v460 = vld [vmem:[%s449 + $0x28] sm:$0xf]
        %v461 = vld [vmem:[%s449 + $0x2c] sm:$0xf]
        %v462 = vld [vmem:[%s449 + $0x30] sm:$0xf]
        %v463 = vld [vmem:[%s449 + $0x34] sm:$0xf]
        %v464 = vld [vmem:[%s449 + $0x38] sm:$0xf]
        %v465 = vld [vmem:[%s449 + $0x3c] sm:$0xf]
        %v498 = vunpack.c.l.b16 %v351
        %v499 = vunpack.c.h.b16 %v351
        %v500 = vunpack.c.l.b16 %v352
        %v501 = vunpack.c.h.b16 %v352
        %v502 = vunpack.c.l.b16 %v353
        %v503 = vunpack.c.h.b16 %v353
        %v504 = vunpack.c.l.b16 %v354
        %v505 = vunpack.c.h.b16 %v354
        %v506 = vunpack.c.l.b16 %v355
        %v507 = vunpack.c.h.b16 %v355
        %v508 = vunpack.c.l.b16 %v356
        %v509 = vunpack.c.h.b16 %v356
        %v510 = vunpack.c.l.b16 %v357
        %v511 = vunpack.c.h.b16 %v357
        %v512 = vunpack.c.l.b16 %v358
        %v513 = vunpack.c.h.b16 %v358
        %v514 = vunpack.c.l.b16 %v359
        %v515 = vunpack.c.h.b16 %v359
        %v516 = vunpack.c.l.b16 %v360
        %v517 = vunpack.c.h.b16 %v360
        %v518 = vunpack.c.l.b16 %v361
        %v519 = vunpack.c.h.b16 %v361
        %v520 = vunpack.c.l.b16 %v362
        %v521 = vunpack.c.h.b16 %v362
        %v522 = vunpack.c.l.b16 %v363
        %v523 = vunpack.c.h.b16 %v363
        %v524 = vunpack.c.l.b16 %v364
        %v525 = vunpack.c.h.b16 %v364
        %v526 = vunpack.c.l.b16 %v365
        %v527 = vunpack.c.h.b16 %v365
        %v528 = vunpack.c.l.b16 %v366
        %v529 = vunpack.c.h.b16 %v366
        %v530 = vunpack.c.l.b16 %v367
        %v531 = vunpack.c.h.b16 %v367
        %v532 = vunpack.c.l.b16 %v368
        %v533 = vunpack.c.h.b16 %v368
        %v534 = vunpack.c.l.b16 %v369
        %v535 = vunpack.c.h.b16 %v369
        %v536 = vunpack.c.l.b16 %v370
        %v537 = vunpack.c.h.b16 %v370
        %v538 = vunpack.c.l.b16 %v371
        %v539 = vunpack.c.h.b16 %v371
        %v540 = vunpack.c.l.b16 %v372
        %v541 = vunpack.c.h.b16 %v372
        %v542 = vunpack.c.l.b16 %v373
        %v543 = vunpack.c.h.b16 %v373
        %v544 = vunpack.c.l.b16 %v374
        %v545 = vunpack.c.h.b16 %v374
        %v546 = vunpack.c.l.b16 %v375
        %v547 = vunpack.c.h.b16 %v375
        %v548 = vunpack.c.l.b16 %v376
        %v549 = vunpack.c.h.b16 %v376
        %v550 = vunpack.c.l.b16 %v377
        %v551 = vunpack.c.h.b16 %v377
        %v552 = vunpack.c.l.b16 %v378
        %v553 = vunpack.c.h.b16 %v378
        %v554 = vunpack.c.l.b16 %v379
        %v555 = vunpack.c.h.b16 %v379
        %v556 = vunpack.c.l.b16 %v380
        %v557 = vunpack.c.h.b16 %v380
        %v558 = vunpack.c.l.b16 %v381
        %v559 = vunpack.c.h.b16 %v381
        %v560 = vunpack.c.l.b16 %v382
        %v561 = vunpack.c.h.b16 %v382
        %v562 = vpack.c.b16 %v500, %v498
        %v563 = vpack.c.b16 %v501, %v499
        %v564 = vpack.c.b16 %v504, %v502
        %v565 = vpack.c.b16 %v505, %v503
        %v566 = vpack.c.b16 %v508, %v506
        %v567 = vpack.c.b16 %v509, %v507
        %v568 = vpack.c.b16 %v512, %v510
        %v569 = vpack.c.b16 %v513, %v511
        %v570 = vpack.c.b16 %v516, %v514
        %v571 = vpack.c.b16 %v517, %v515
        %v572 = vpack.c.b16 %v520, %v518
        %v573 = vpack.c.b16 %v521, %v519
        %v574 = vpack.c.b16 %v524, %v522
        %v575 = vpack.c.b16 %v525, %v523
        %v576 = vpack.c.b16 %v528, %v526
        %v577 = vpack.c.b16 %v529, %v527
        %v578 = vpack.c.b16 %v532, %v530
        %v579 = vpack.c.b16 %v533, %v531
        %v580 = vpack.c.b16 %v536, %v534
        %v581 = vpack.c.b16 %v537, %v535
        %v582 = vpack.c.b16 %v540, %v538
        %v583 = vpack.c.b16 %v541, %v539
        %v584 = vpack.c.b16 %v544, %v542
        %v585 = vpack.c.b16 %v545, %v543
        %v586 = vpack.c.b16 %v548, %v546
        %v587 = vpack.c.b16 %v549, %v547
        %v588 = vpack.c.b16 %v552, %v550
        %v589 = vpack.c.b16 %v553, %v551
        %v590 = vpack.c.b16 %v556, %v554
        %v591 = vpack.c.b16 %v557, %v555
        %v592 = vpack.c.b16 %v560, %v558
        %v593 = vpack.c.b16 %v561, %v559
        %v658 = vunpack.c.l.b16 %v383
        %v659 = vunpack.c.l.b16 %v384
        %v660 = vunpack.c.l.b16 %v385
        %v661 = vunpack.c.l.b16 %v386
        %v662 = vunpack.c.l.b16 %v387
        %v663 = vunpack.c.l.b16 %v388
        %v664 = vunpack.c.l.b16 %v389
        %v665 = vunpack.c.l.b16 %v390
        %v666 = vunpack.c.l.b16 %v391
        %v667 = vunpack.c.l.b16 %v392
        %v668 = vunpack.c.l.b16 %v393
        %v669 = vunpack.c.l.b16 %v394
        %v670 = vunpack.c.l.b16 %v395
        %v671 = vunpack.c.l.b16 %v396
        %v672 = vunpack.c.l.b16 %v397
        %v673 = vunpack.c.l.b16 %v398
        %v674 = vunpack.c.l.b16 %v399
        %v675 = vunpack.c.l.b16 %v400
        %v676 = vunpack.c.l.b16 %v401
        %v677 = vunpack.c.l.b16 %v402
        %v678 = vunpack.c.l.b16 %v403
        %v679 = vunpack.c.l.b16 %v404
        %v680 = vunpack.c.l.b16 %v405
        %v681 = vunpack.c.l.b16 %v406
        %v682 = vunpack.c.l.b16 %v407
        %v683 = vunpack.c.l.b16 %v408
        %v684 = vunpack.c.l.b16 %v409
        %v685 = vunpack.c.l.b16 %v410
        %v686 = vunpack.c.l.b16 %v411
        %v687 = vunpack.c.l.b16 %v412
        %v688 = vunpack.c.l.b16 %v413
        %v689 = vunpack.c.l.b16 %v414
        %v690 = vpack.c.b16 %v659, %v658
        %v691 = vpack.c.b16 %v661, %v660
        %v692 = vpack.c.b16 %v663, %v662
        %v693 = vpack.c.b16 %v665, %v664
        %v694 = vpack.c.b16 %v667, %v666
        %v695 = vpack.c.b16 %v669, %v668
        %v696 = vpack.c.b16 %v671, %v670
        %v697 = vpack.c.b16 %v673, %v672
        %v698 = vpack.c.b16 %v675, %v674
        %v699 = vpack.c.b16 %v677, %v676
        %v700 = vpack.c.b16 %v679, %v678
        %v701 = vpack.c.b16 %v681, %v680
        %v702 = vpack.c.b16 %v683, %v682
        %v703 = vpack.c.b16 %v685, %v684
        %v704 = vpack.c.b16 %v687, %v686
        %v705 = vpack.c.b16 %v689, %v688
        %722 = vmatprep.subr.bf16.mxu0 0
        %723 = vmatpush1.bf16.msra.mxu0 %v690
        %724 = vmatprep.subr.bf16.mxu0 0
        %725 = vmatpush1.bf16.msra.mxu0 %v691
        %726 = vmatprep.subr.bf16.mxu0 0
        %727 = vmatpush1.bf16.msra.mxu0 %v692
        %728 = vmatprep.subr.bf16.mxu0 0
        %729 = vmatpush1.bf16.msra.mxu0 %v693
        %730 = vmatprep.subr.bf16.mxu0 0
        %731 = vmatpush1.bf16.msra.mxu0 %v694
        %732 = vmatprep.subr.bf16.mxu0 0
        %733 = vmatpush1.bf16.msra.mxu0 %v695
        %734 = vmatprep.subr.bf16.mxu0 0
        %735 = vmatpush1.bf16.msra.mxu0 %v696
        %736 = vmatprep.subr.bf16.mxu0 0
        %737 = vmatpush1.bf16.msra.mxu0 %v697
        %738 = vmatprep.subr.bf16.mxu0 0
        %739 = vmatpush1.bf16.msra.mxu0 %v698
        %740 = vmatprep.subr.bf16.mxu0 0
        %741 = vmatpush1.bf16.msra.mxu0 %v699
        %742 = vmatprep.subr.bf16.mxu0 0
        %743 = vmatpush1.bf16.msra.mxu0 %v700
        %744 = vmatprep.subr.bf16.mxu0 0
        %745 = vmatpush1.bf16.msra.mxu0 %v701
        %746 = vmatprep.subr.bf16.mxu0 0
        %747 = vmatpush1.bf16.msra.mxu0 %v702
        %748 = vmatprep.subr.bf16.mxu0 0
        %749 = vmatpush1.bf16.msra.mxu0 %v703
        %750 = vmatprep.subr.bf16.mxu0 0
        %751 = vmatpush1.bf16.msra.mxu0 %v704
        %752 = vmatprep.subr.bf16.mxu0 0
        %753 = vmatpush1.bf16.msra.mxu0 %v705
        %754 = vmatprep.mubr.bf16.mxu0 %v563
        %755 = vmatmul.mubr.bf16.gmra.mrb[0].mxu0 %v562
        %v756 = vpop.f32.mrb[0].mxu0
        %v757 = vadd.f32 0.0, %v756
        %v758 = vpop.f32.mrb[0].mxu0
        %v759 = vpop.f32.mrb[0].mxu0
        %v760 = vadd.f32 0.0, %v759
        %v761 = vpop.f32.mrb[0].mxu0
        %762 = vmatprep.mubr.bf16.mxu0 %v565
        %763 = vmatmul.mubr.bf16.gmra.mrb[0].mxu0 %v564
        %v764 = vpop.f32.mrb[0].mxu0
        %v765 = vadd.f32 0.0, %v764
        %v766 = vpop.f32.mrb[0].mxu0
        %v767 = vpop.f32.mrb[0].mxu0
        %v768 = vadd.f32 0.0, %v767
        %v769 = vpop.f32.mrb[0].mxu0
        %770 = vmatprep.mubr.bf16.mxu0 %v567
        %771 = vmatmul.mubr.bf16.gmra.mrb[0].mxu0 %v566
        %v772 = vpop.f32.mrb[0].mxu0
        %v773 = vadd.f32 0.0, %v772
        %v774 = vpop.f32.mrb[0].mxu0
        %v775 = vpop.f32.mrb[0].mxu0
        %v776 = vadd.f32 0.0, %v775
        %v777 = vpop.f32.mrb[0].mxu0
        %778 = vmatprep.mubr.bf16.mxu0 %v569
        %779 = vmatmul.mubr.bf16.gmra.mrb[0].mxu0 %v568
        %v780 = vpop.f32.mrb[0].mxu0
        %v781 = vadd.f32 0.0, %v780
        %v782 = vpop.f32.mrb[0].mxu0
        %v783 = vpop.f32.mrb[0].mxu0
        %v784 = vadd.f32 0.0, %v783
        %v785 = vpop.f32.mrb[0].mxu0
        %786 = vmatprep.mubr.bf16.mxu0 %v571
        %787 = vmatmul.mubr.bf16.gmra.mrb[0].mxu0 %v570
        %v788 = vpop.f32.mrb[0].mxu0
        %v789 = vadd.f32 0.0, %v788
        %v790 = vpop.f32.mrb[0].mxu0
        %v791 = vpop.f32.mrb[0].mxu0
        %v792 = vadd.f32 0.0, %v791
        %v793 = vpop.f32.mrb[0].mxu0
        %794 = vmatprep.mubr.bf16.mxu0 %v573
        %795 = vmatmul.mubr.bf16.gmra.mrb[0].mxu0 %v572
        %v796 = vpop.f32.mrb[0].mxu0
        %v797 = vadd.f32 0.0, %v796
        %v798 = vpop.f32.mrb[0].mxu0
        %v799 = vpop.f32.mrb[0].mxu0
        %v800 = vadd.f32 0.0, %v799
        %v801 = vpop.f32.mrb[0].mxu0
        %802 = vmatprep.mubr.bf16.mxu0 %v575
        %803 = vmatmul.mubr.bf16.gmra.mrb[0].mxu0 %v574
        %v804 = vpop.f32.mrb[0].mxu0
        %v805 = vadd.f32 0.0, %v804
        %v806 = vpop.f32.mrb[0].mxu0
        %v807 = vpop.f32.mrb[0].mxu0
        %v808 = vadd.f32 0.0, %v807
        %v809 = vpop.f32.mrb[0].mxu0
        %810 = vmatprep.mubr.bf16.mxu0 %v577
        %811 = vmatmul.mubr.bf16.gmra.mrb[0].mxu0 %v576
        %v812 = vpop.f32.mrb[0].mxu0
        %v813 = vadd.f32 0.0, %v812
        %v814 = vpop.f32.mrb[0].mxu0
        %v815 = vpop.f32.mrb[0].mxu0
        %v816 = vadd.f32 0.0, %v815
        %v817 = vpop.f32.mrb[0].mxu0
        %818 = vmatprep.mubr.bf16.mxu0 %v579
        %819 = vmatmul.mubr.bf16.gmra.mrb[0].mxu0 %v578
        %v820 = vpop.f32.mrb[0].mxu0
        %v821 = vadd.f32 0.0, %v820
        %v822 = vpop.f32.mrb[0].mxu0
        %v823 = vpop.f32.mrb[0].mxu0
        %v824 = vadd.f32 0.0, %v823
        %v825 = vpop.f32.mrb[0].mxu0
        %826 = vmatprep.mubr.bf16.mxu0 %v581
        %827 = vmatmul.mubr.bf16.gmra.mrb[0].mxu0 %v580
        %v828 = vpop.f32.mrb[0].mxu0
        %v829 = vadd.f32 0.0, %v828
        %v830 = vpop.f32.mrb[0].mxu0
        %v831 = vpop.f32.mrb[0].mxu0
        %v832 = vadd.f32 0.0, %v831
        %v833 = vpop.f32.mrb[0].mxu0
        %834 = vmatprep.mubr.bf16.mxu0 %v583
        %835 = vmatmul.mubr.bf16.gmra.mrb[0].mxu0 %v582
        %v836 = vpop.f32.mrb[0].mxu0
        %v837 = vadd.f32 0.0, %v836
        %v838 = vpop.f32.mrb[0].mxu0
        %v839 = vpop.f32.mrb[0].mxu0
        %v840 = vadd.f32 0.0, %v839
        %v841 = vpop.f32.mrb[0].mxu0
        %842 = vmatprep.mubr.bf16.mxu0 %v585
        %843 = vmatmul.mubr.bf16.gmra.mrb[0].mxu0 %v584
        %v844 = vpop.f32.mrb[0].mxu0
        %v845 = vadd.f32 0.0, %v844
        %v846 = vpop.f32.mrb[0].mxu0
        %v847 = vpop.f32.mrb[0].mxu0
        %v848 = vadd.f32 0.0, %v847
        %v849 = vpop.f32.mrb[0].mxu0
        %850 = vmatprep.mubr.bf16.mxu0 %v587
        %851 = vmatmul.mubr.bf16.gmra.mrb[0].mxu0 %v586
        %v852 = vpop.f32.mrb[0].mxu0
        %v853 = vadd.f32 0.0, %v852
        %v854 = vpop.f32.mrb[0].mxu0
        %v855 = vpop.f32.mrb[0].mxu0
        %v856 = vadd.f32 0.0, %v855
        %v857 = vpop.f32.mrb[0].mxu0
        %858 = vmatprep.mubr.bf16.mxu0 %v589
        %859 = vmatmul.mubr.bf16.gmra.mrb[0].mxu0 %v588
        %v860 = vpop.f32.mrb[0].mxu0
        %v861 = vadd.f32 0.0, %v860
        %v862 = vpop.f32.mrb[0].mxu0
        %v863 = vpop.f32.mrb[0].mxu0
        %v864 = vadd.f32 0.0, %v863
        %v865 = vpop.f32.mrb[0].mxu0
        %866 = vmatprep.mubr.bf16.mxu0 %v591
        %867 = vmatmul.mubr.bf16.gmra.mrb[0].mxu0 %v590
        %v868 = vpop.f32.mrb[0].mxu0
        %v869 = vadd.f32 0.0, %v868
        %v870 = vpop.f32.mrb[0].mxu0
        %v871 = vpop.f32.mrb[0].mxu0
        %v872 = vadd.f32 0.0, %v871
        %v873 = vpop.f32.mrb[0].mxu0
        %874 = vmatprep.mubr.bf16.mxu0 %v593
        %875 = vmatmul.mubr.bf16.gmra.mrb[0].mxu0 %v592
        %v876 = vpop.f32.mrb[0].mxu0
        %v877 = vadd.f32 0.0, %v876
        %v878 = vpop.f32.mrb[0].mxu0
        %v879 = vpop.f32.mrb[0].mxu0
        %v880 = vadd.f32 0.0, %v879
        %v881 = vpop.f32.mrb[0].mxu0
        %882 = vdwg.mxu0
        %v883 = vpack.c.bf16 %v760, %v757
        %v884 = vpack.c.bf16 %v768, %v765
        %v885 = vpack.c.bf16 %v776, %v773
        %v886 = vpack.c.bf16 %v784, %v781
        %v887 = vpack.c.bf16 %v792, %v789
        %v888 = vpack.c.bf16 %v800, %v797
        %v889 = vpack.c.bf16 %v808, %v805
        %v890 = vpack.c.bf16 %v816, %v813
        %v891 = vpack.c.bf16 %v824, %v821
        %v892 = vpack.c.bf16 %v832, %v829
        %v893 = vpack.c.bf16 %v840, %v837
        %v894 = vpack.c.bf16 %v848, %v845
        %v895 = vpack.c.bf16 %v856, %v853
        %v896 = vpack.c.bf16 %v864, %v861
        %v897 = vpack.c.bf16 %v872, %v869
        %v898 = vpack.c.bf16 %v880, %v877
        %v899 = vlaneseq
        %v900 = vshrl.u32 %v899, 7
        %v901 = vsub.s32 0, %v900
        %v902 = vrot.slane %v349, %v901
        %v919 = vunpack.c.l.b16 %v416
        %v920 = vunpack.c.l.b16 %v417
        %v921 = vunpack.c.l.b16 %v418
        %v922 = vunpack.c.l.b16 %v419
        %v923 = vunpack.c.l.b16 %v420
        %v924 = vunpack.c.l.b16 %v421
        %v925 = vunpack.c.l.b16 %v422
        %v926 = vunpack.c.l.b16 %v423
        %v927 = vunpack.c.l.b16 %v424
        %v928 = vunpack.c.l.b16 %v425
        %v929 = vunpack.c.l.b16 %v426
        %v930 = vunpack.c.l.b16 %v427
        %v931 = vunpack.c.l.b16 %v428
        %v932 = vunpack.c.l.b16 %v429
        %v933 = vunpack.c.l.b16 %v430
        %v934 = vunpack.c.l.b16 %v431
        %v935 = vpack.c.b16 %v920, %v919
        %v936 = vpack.c.b16 %v922, %v921
        %v937 = vpack.c.b16 %v924, %v923
        %v938 = vpack.c.b16 %v926, %v925
        %v939 = vpack.c.b16 %v928, %v927
        %v940 = vpack.c.b16 %v930, %v929
        %v941 = vpack.c.b16 %v932, %v931
        %v942 = vpack.c.b16 %v934, %v933
        %951 = vmatprep.subr.bf16.mxu0 0
        %952 = vmatpush1.bf16.msra.mxu0 %v935
        %953 = vmatprep.subr.bf16.mxu0 0
        %954 = vmatpush1.bf16.msra.mxu0 %v936
        %955 = vmatprep.subr.bf16.mxu0 0
        %956 = vmatpush1.bf16.msra.mxu0 %v937
        %957 = vmatprep.subr.bf16.mxu0 0
        %958 = vmatpush1.bf16.msra.mxu0 %v938
        %959 = vmatprep.subr.bf16.mxu0 0
        %960 = vmatpush1.bf16.msra.mxu0 %v939
        %961 = vmatprep.subr.bf16.mxu0 0
        %962 = vmatpush1.bf16.msra.mxu0 %v940
        %963 = vmatprep.subr.bf16.mxu0 0
        %964 = vmatpush1.bf16.msra.mxu0 %v941
        %965 = vmatprep.subr.bf16.mxu0 0
        %966 = vmatpush1.bf16.msra.mxu0 %v942
        %967 = vmatprep.subr.bf16.mxu0 0
        %968 = vmatpush1.bf16.msra.mxu0 0
        %969 = vmatprep.subr.bf16.mxu0 0
        %970 = vmatpush1.bf16.msra.mxu0 0
        %971 = vmatprep.subr.bf16.mxu0 0
        %972 = vmatpush1.bf16.msra.mxu0 0
        %973 = vmatprep.subr.bf16.mxu0 0
        %974 = vmatpush1.bf16.msra.mxu0 0
        %975 = vmatprep.subr.bf16.mxu0 0
        %976 = vmatpush1.bf16.msra.mxu0 0
        %977 = vmatprep.subr.bf16.mxu0 0
        %978 = vmatpush1.bf16.msra.mxu0 0
        %979 = vmatprep.subr.bf16.mxu0 0
        %980 = vmatpush1.bf16.msra.mxu0 0
        %981 = vmatprep.subr.bf16.mxu0 0
        %982 = vmatpush1.bf16.msra.mxu0 0
        %983 = vmatprep.mubr.bf16.mxu0 0
        %984 = vmatmul.mubr.bf16.gmra.mrb[0].mxu0 %v883
        %v985 = vpop.f32.mrb[0].mxu0
        %v986 = vadd.f32 %v902, %v985
        %v987 = vpop.f32.mrb[0].mxu0
        %v988 = vpop.f32.mrb[0].mxu0
        %v989 = vadd.f32 %v902, %v988
        %v990 = vpop.f32.mrb[0].mxu0
        %991 = vmatprep.mubr.bf16.mxu0 0
        %992 = vmatmul.mubr.bf16.gmra.mrb[0].mxu0 %v884
        %v993 = vpop.f32.mrb[0].mxu0
        %v994 = vadd.f32 %v902, %v993
        %v995 = vpop.f32.mrb[0].mxu0
        %v996 = vpop.f32.mrb[0].mxu0
        %v997 = vadd.f32 %v902, %v996
        %v998 = vpop.f32.mrb[0].mxu0
        %999 = vmatprep.mubr.bf16.mxu0 0
        %1000 = vmatmul.mubr.bf16.gmra.mrb[0].mxu0 %v885
        %v1001 = vpop.f32.mrb[0].mxu0
        %v1002 = vadd.f32 %v902, %v1001
        %v1003 = vpop.f32.mrb[0].mxu0
        %v1004 = vpop.f32.mrb[0].mxu0
        %v1005 = vadd.f32 %v902, %v1004
        %v1006 = vpop.f32.mrb[0].mxu0
        %1007 = vmatprep.mubr.bf16.mxu0 0
        %1008 = vmatmul.mubr.bf16.gmra.mrb[0].mxu0 %v886
        %v1009 = vpop.f32.mrb[0].mxu0
        %v1010 = vadd.f32 %v902, %v1009
        %v1011 = vpop.f32.mrb[0].mxu0
        %v1012 = vpop.f32.mrb[0].mxu0
        %v1013 = vadd.f32 %v902, %v1012
        %v1014 = vpop.f32.mrb[0].mxu0
        %1015 = vmatprep.mubr.bf16.mxu0 0
        %1016 = vmatmul.mubr.bf16.gmra.mrb[0].mxu0 %v887
        %v1017 = vpop.f32.mrb[0].mxu0
        %v1018 = vadd.f32 %v902, %v1017
        %v1019 = vpop.f32.mrb[0].mxu0
        %v1020 = vpop.f32.mrb[0].mxu0
        %v1021 = vadd.f32 %v902, %v1020
        %v1022 = vpop.f32.mrb[0].mxu0
        %1023 = vmatprep.mubr.bf16.mxu0 0
        %1024 = vmatmul.mubr.bf16.gmra.mrb[0].mxu0 %v888
        %v1025 = vpop.f32.mrb[0].mxu0
        %v1026 = vadd.f32 %v902, %v1025
        %v1027 = vpop.f32.mrb[0].mxu0
        %v1028 = vpop.f32.mrb[0].mxu0
        %v1029 = vadd.f32 %v902, %v1028
        %v1030 = vpop.f32.mrb[0].mxu0
        %1031 = vmatprep.mubr.bf16.mxu0 0
        %1032 = vmatmul.mubr.bf16.gmra.mrb[0].mxu0 %v889
        %v1033 = vpop.f32.mrb[0].mxu0
        %v1034 = vadd.f32 %v902, %v1033
        %v1035 = vpop.f32.mrb[0].mxu0
        %v1036 = vpop.f32.mrb[0].mxu0
        %v1037 = vadd.f32 %v902, %v1036
        %v1038 = vpop.f32.mrb[0].mxu0
        %1039 = vmatprep.mubr.bf16.mxu0 0
        %1040 = vmatmul.mubr.bf16.gmra.mrb[0].mxu0 %v890
        %v1041 = vpop.f32.mrb[0].mxu0
        %v1042 = vadd.f32 %v902, %v1041
        %v1043 = vpop.f32.mrb[0].mxu0
        %v1044 = vpop.f32.mrb[0].mxu0
        %v1045 = vadd.f32 %v902, %v1044
        %v1046 = vpop.f32.mrb[0].mxu0
        %1047 = vmatprep.mubr.bf16.mxu0 0
        %1048 = vmatmul.mubr.bf16.gmra.mrb[0].mxu0 %v891
        %v1049 = vpop.f32.mrb[0].mxu0
        %v1050 = vadd.f32 %v902, %v1049
        %v1051 = vpop.f32.mrb[0].mxu0
        %v1052 = vpop.f32.mrb[0].mxu0
        %v1053 = vadd.f32 %v902, %v1052
        %v1054 = vpop.f32.mrb[0].mxu0
        %1055 = vmatprep.mubr.bf16.mxu0 0
        %1056 = vmatmul.mubr.bf16.gmra.mrb[0].mxu0 %v892
        %v1057 = vpop.f32.mrb[0].mxu0
        %v1058 = vadd.f32 %v902, %v1057
        %v1059 = vpop.f32.mrb[0].mxu0
        %v1060 = vpop.f32.mrb[0].mxu0
        %v1061 = vadd.f32 %v902, %v1060
        %v1062 = vpop.f32.mrb[0].mxu0
        %1063 = vmatprep.mubr.bf16.mxu0 0
        %1064 = vmatmul.mubr.bf16.gmra.mrb[0].mxu0 %v893
        %v1065 = vpop.f32.mrb[0].mxu0
        %v1066 = vadd.f32 %v902, %v1065
        %v1067 = vpop.f32.mrb[0].mxu0
        %v1068 = vpop.f32.mrb[0].mxu0
        %v1069 = vadd.f32 %v902, %v1068
        %v1070 = vpop.f32.mrb[0].mxu0
        %1071 = vmatprep.mubr.bf16.mxu0 0
        %1072 = vmatmul.mubr.bf16.gmra.mrb[0].mxu0 %v894
        %v1073 = vpop.f32.mrb[0].mxu0
        %v1074 = vadd.f32 %v902, %v1073
        %v1075 = vpop.f32.mrb[0].mxu0
        %v1076 = vpop.f32.mrb[0].mxu0
        %v1077 = vadd.f32 %v902, %v1076
        %v1078 = vpop.f32.mrb[0].mxu0
        %1079 = vmatprep.mubr.bf16.mxu0 0
        %1080 = vmatmul.mubr.bf16.gmra.mrb[0].mxu0 %v895
        %v1081 = vpop.f32.mrb[0].mxu0
        %v1082 = vadd.f32 %v902, %v1081
        %v1083 = vpop.f32.mrb[0].mxu0
        %v1084 = vpop.f32.mrb[0].mxu0
        %v1085 = vadd.f32 %v902, %v1084
        %v1086 = vpop.f32.mrb[0].mxu0
        %1087 = vmatprep.mubr.bf16.mxu0 0
        %1088 = vmatmul.mubr.bf16.gmra.mrb[0].mxu0 %v896
        %v1089 = vpop.f32.mrb[0].mxu0
        %v1090 = vadd.f32 %v902, %v1089
        %v1091 = vpop.f32.mrb[0].mxu0
        %v1092 = vpop.f32.mrb[0].mxu0
        %v1093 = vadd.f32 %v902, %v1092
        %v1094 = vpop.f32.mrb[0].mxu0
        %1095 = vmatprep.mubr.bf16.mxu0 0
        %1096 = vmatmul.mubr.bf16.gmra.mrb[0].mxu0 %v897
        %v1097 = vpop.f32.mrb[0].mxu0
        %v1098 = vadd.f32 %v902, %v1097
        %v1099 = vpop.f32.mrb[0].mxu0
        %v1100 = vpop.f32.mrb[0].mxu0
        %v1101 = vadd.f32 %v902, %v1100
        %v1102 = vpop.f32.mrb[0].mxu0
        %1103 = vmatprep.mubr.bf16.mxu0 0
        %1104 = vmatmul.mubr.bf16.gmra.mrb[0].mxu0 %v898
        %v1105 = vpop.f32.mrb[0].mxu0
        %v1106 = vadd.f32 %v902, %v1105
        %v1107 = vpop.f32.mrb[0].mxu0
        %v1108 = vpop.f32.mrb[0].mxu0
        %v1109 = vadd.f32 %v902, %v1108
        %v1110 = vpop.f32.mrb[0].mxu0
        %1111 = vdwg.mxu0
        %v1112 = vpack.c.bf16 %v989, %v986
        %v1113 = vpack.c.bf16 %v997, %v994
        %v1114 = vpack.c.bf16 %v1005, %v1002
        %v1115 = vpack.c.bf16 %v1013, %v1010
        %v1116 = vpack.c.bf16 %v1021, %v1018
        %v1117 = vpack.c.bf16 %v1029, %v1026
        %v1118 = vpack.c.bf16 %v1037, %v1034
        %v1119 = vpack.c.bf16 %v1045, %v1042
        %v1120 = vpack.c.bf16 %v1053, %v1050
        %v1121 = vpack.c.bf16 %v1061, %v1058
        %v1122 = vpack.c.bf16 %v1069, %v1066
        %v1123 = vpack.c.bf16 %v1077, %v1074
        %v1124 = vpack.c.bf16 %v1085, %v1082
        %v1125 = vpack.c.bf16 %v1093, %v1090
        %v1126 = vpack.c.bf16 %v1101, %v1098
        %v1127 = vpack.c.bf16 %v1109, %v1106
        %1128 = vmatprep.subr.bf16.mxu0 0
        %1129 = vmatpush1.bf16.msra.mxu0 %v1112
        %1130 = vmatprep.subr.bf16.mxu0 0
        %1131 = vmatpush1.bf16.msra.mxu0 %v1113
        %1132 = vmatprep.subr.bf16.mxu0 0
        %1133 = vmatpush1.bf16.msra.mxu0 %v1114
        %1134 = vmatprep.subr.bf16.mxu0 0
        %1135 = vmatpush1.bf16.msra.mxu0 %v1115
        %1136 = vmatprep.subr.bf16.mxu0 0
        %1137 = vmatpush1.bf16.msra.mxu0 %v1116
        %1138 = vmatprep.subr.bf16.mxu0 0
        %1139 = vmatpush1.bf16.msra.mxu0 %v1117
        %1140 = vmatprep.subr.bf16.mxu0 0
        %1141 = vmatpush1.bf16.msra.mxu0 %v1118
        %1142 = vmatprep.subr.bf16.mxu0 0
        %1143 = vmatpush1.bf16.msra.mxu0 %v1119
        %1144 = vmatprep.subr.bf16.mxu0 0
        %1145 = vmatpush1.bf16.msra.mxu0 %v1120
        %1146 = vmatprep.subr.bf16.mxu0 0
        %1147 = vmatpush1.bf16.msra.mxu0 %v1121
        %1148 = vmatprep.subr.bf16.mxu0 0
        %1149 = vmatpush1.bf16.msra.mxu0 %v1122
        %1150 = vmatprep.subr.bf16.mxu0 0
        %1151 = vmatpush1.bf16.msra.mxu0 %v1123
        %1152 = vmatprep.subr.bf16.mxu0 0
        %1153 = vmatpush1.bf16.msra.mxu0 %v1124
        %1154 = vmatprep.subr.bf16.mxu0 0
        %1155 = vmatpush1.bf16.msra.mxu0 %v1125
        %1156 = vmatprep.subr.bf16.mxu0 0
        %1157 = vmatpush1.bf16.msra.mxu0 %v1126
        %1158 = vmatprep.subr.bf16.mxu0 0
        %1159 = vmatpush1.bf16.msra.mxu0 %v1127
        %1160 = vmatprep.mubr.bf16.mxu0 1065369472
        %1161 = vmatmul.mubr.bf16.gmra.mrb[0].mxu0 1065369472
        %v1162 = vpop.f32.mrb[0].mxu0
        %v1163 = vadd.f32 0.0, %v1162
        %v1164 = vpop.f32.mrb[0].mxu0
        %v1165 = vpop.f32.mrb[0].mxu0
        %v1166 = vpop.f32.mrb[0].mxu0
        %1167 = vdwg.mxu0
        %v1168 = vmul.f32 %v1163, 0.00390625
        %v1169 = vmul.f32 %v986, %v986
        %v1170 = vmul.f32 %v989, %v989
        %v1171 = vmul.f32 %v994, %v994
        %v1172 = vmul.f32 %v997, %v997
        %v1173 = vmul.f32 %v1002, %v1002
        %v1174 = vmul.f32 %v1005, %v1005
        %v1175 = vmul.f32 %v1010, %v1010
        %v1176 = vmul.f32 %v1013, %v1013
        %v1177 = vmul.f32 %v1018, %v1018
        %v1178 = vmul.f32 %v1021, %v1021
        %v1179 = vmul.f32 %v1026, %v1026
        %v1180 = vmul.f32 %v1029, %v1029
        %v1181 = vmul.f32 %v1034, %v1034
        %v1182 = vmul.f32 %v1037, %v1037
        %v1183 = vmul.f32 %v1042, %v1042
        %v1184 = vmul.f32 %v1045, %v1045
        %v1185 = vmul.f32 %v1050, %v1050
        %v1186 = vmul.f32 %v1053, %v1053
        %v1187 = vmul.f32 %v1058, %v1058
        %v1188 = vmul.f32 %v1061, %v1061
        %v1189 = vmul.f32 %v1066, %v1066
        %v1190 = vmul.f32 %v1069, %v1069
        %v1191 = vmul.f32 %v1074, %v1074
        %v1192 = vmul.f32 %v1077, %v1077
        %v1193 = vmul.f32 %v1082, %v1082
        %v1194 = vmul.f32 %v1085, %v1085
        %v1195 = vmul.f32 %v1090, %v1090
        %v1196 = vmul.f32 %v1093, %v1093
        %v1197 = vmul.f32 %v1098, %v1098
        %v1198 = vmul.f32 %v1101, %v1101
        %v1199 = vmul.f32 %v1106, %v1106
        %v1200 = vmul.f32 %v1109, %v1109
        %v1201 = vpack.c.bf16 %v1170, %v1169
        %v1202 = vpack.c.bf16 %v1172, %v1171
        %v1203 = vpack.c.bf16 %v1174, %v1173
        %v1204 = vpack.c.bf16 %v1176, %v1175
        %v1205 = vpack.c.bf16 %v1178, %v1177
        %v1206 = vpack.c.bf16 %v1180, %v1179
        %v1207 = vpack.c.bf16 %v1182, %v1181
        %v1208 = vpack.c.bf16 %v1184, %v1183
        %v1209 = vpack.c.bf16 %v1186, %v1185
        %v1210 = vpack.c.bf16 %v1188, %v1187
        %v1211 = vpack.c.bf16 %v1190, %v1189
        %v1212 = vpack.c.bf16 %v1192, %v1191
        %v1213 = vpack.c.bf16 %v1194, %v1193
        %v1214 = vpack.c.bf16 %v1196, %v1195
        %v1215 = vpack.c.bf16 %v1198, %v1197
        %v1216 = vpack.c.bf16 %v1200, %v1199
        %1217 = vmatprep.subr.bf16.mxu0 0
        %1218 = vmatpush1.bf16.msra.mxu0 %v1201
        %1219 = vmatprep.subr.bf16.mxu0 0
        %1220 = vmatpush1.bf16.msra.mxu0 %v1202
        %1221 = vmatprep.subr.bf16.mxu0 0
        %1222 = vmatpush1.bf16.msra.mxu0 %v1203
        %1223 = vmatprep.subr.bf16.mxu0 0
        %1224 = vmatpush1.bf16.msra.mxu0 %v1204
        %1225 = vmatprep.subr.bf16.mxu0 0
        %1226 = vmatpush1.bf16.msra.mxu0 %v1205
        %1227 = vmatprep.subr.bf16.mxu0 0
        %1228 = vmatpush1.bf16.msra.mxu0 %v1206
        %1229 = vmatprep.subr.bf16.mxu0 0
        %1230 = vmatpush1.bf16.msra.mxu0 %v1207
        %1231 = vmatprep.subr.bf16.mxu0 0
        %1232 = vmatpush1.bf16.msra.mxu0 %v1208
        %1233 = vmatprep.subr.bf16.mxu0 0
        %1234 = vmatpush1.bf16.msra.mxu0 %v1209
        %1235 = vmatprep.subr.bf16.mxu0 0
        %1236 = vmatpush1.bf16.msra.mxu0 %v1210
        %1237 = vmatprep.subr.bf16.mxu0 0
        %1238 = vmatpush1.bf16.msra.mxu0 %v1211
        %1239 = vmatprep.subr.bf16.mxu0 0
        %1240 = vmatpush1.bf16.msra.mxu0 %v1212
        %1241 = vmatprep.subr.bf16.mxu0 0
        %1242 = vmatpush1.bf16.msra.mxu0 %v1213
        %1243 = vmatprep.subr.bf16.mxu0 0
        %1244 = vmatpush1.bf16.msra.mxu0 %v1214
        %1245 = vmatprep.subr.bf16.mxu0 0
        %1246 = vmatpush1.bf16.msra.mxu0 %v1215
        %1247 = vmatprep.subr.bf16.mxu0 0
        %1248 = vmatpush1.bf16.msra.mxu0 %v1216
        %1249 = vmatprep.mubr.bf16.mxu0 1065369472
        %1250 = vmatmul.mubr.bf16.gmra.mrb[0].mxu0 1065369472
        %v1251 = vpop.f32.mrb[0].mxu0
        %v1252 = vadd.f32 0.0, %v1251
        %v1253 = vpop.f32.mrb[0].mxu0
        %v1254 = vpop.f32.mrb[0].mxu0
        %v1255 = vpop.f32.mrb[0].mxu0
        %1256 = vdwg.mxu0
        %v1257 = vmul.f32 %v1252, 0.00390625
        %v1258 = vmul.f32 %v349, 2.0
        %v1259 = vmul.f32 %v349, %v349
        %v1260 = vsub.f32 %v1258, %v1259
        %v1261 = vmul.f32 %v1168, %v1168
        %v1263 = vrot.slane %v1261, 5
        %v1265 = vmul.f32 %v1260, %v1263
        %v1267 = vrot.slane %v1265, 3
        %v1269 = vsub.f32 %v1257, %v1267
        %v1270 = vmax.f32 %v1269, 0.0
        %v1272 = vrot.slane %v1168, 5
        %v1274 = vmul.f32 %v349, %v1272
        %v1275 = vlaneseq
        %v1276 = vshrl.u32 %v1275, 7
        %v1277 = vsub.s32 3, %v1276
        %v1278 = vrot.slane %v1274, %v1277
        %v1279 = vsub.f32 %v986, %v1278
        %v1280 = vsub.f32 %v989, %v1278
        %v1281 = vsub.f32 %v994, %v1278
        %v1282 = vsub.f32 %v997, %v1278
        %v1283 = vsub.f32 %v1002, %v1278
        %v1284 = vsub.f32 %v1005, %v1278
        %v1285 = vsub.f32 %v1010, %v1278
        %v1286 = vsub.f32 %v1013, %v1278
        %v1287 = vsub.f32 %v1018, %v1278
        %v1288 = vsub.f32 %v1021, %v1278
        %v1289 = vsub.f32 %v1026, %v1278
        %v1290 = vsub.f32 %v1029, %v1278
        %v1291 = vsub.f32 %v1034, %v1278
        %v1292 = vsub.f32 %v1037, %v1278
        %v1293 = vsub.f32 %v1042, %v1278
        %v1294 = vsub.f32 %v1045, %v1278
        %v1295 = vsub.f32 %v1050, %v1278
        %v1296 = vsub.f32 %v1053, %v1278
        %v1297 = vsub.f32 %v1058, %v1278
        %v1298 = vsub.f32 %v1061, %v1278
        %v1299 = vsub.f32 %v1066, %v1278
        %v1300 = vsub.f32 %v1069, %v1278
        %v1301 = vsub.f32 %v1074, %v1278
        %v1302 = vsub.f32 %v1077, %v1278
        %v1303 = vsub.f32 %v1082, %v1278
        %v1304 = vsub.f32 %v1085, %v1278
        %v1305 = vsub.f32 %v1090, %v1278
        %v1306 = vsub.f32 %v1093, %v1278
        %v1307 = vsub.f32 %v1098, %v1278
        %v1308 = vsub.f32 %v1101, %v1278
        %v1309 = vsub.f32 %v1106, %v1278
        %v1310 = vsub.f32 %v1109, %v1278
        %v1311 = vlaneseq
        %v1312 = vshrl.u32 %v1311, 7
        %v1313 = vsub.s32 1, %v1312
        %v1314 = vrot.slane %v349, %v1313
        %v1315 = vmul.f32 %v1314, %v1279
        %v1316 = vmul.f32 %v1314, %v1280
        %v1317 = vmul.f32 %v1314, %v1281
        %v1318 = vmul.f32 %v1314, %v1282
        %v1319 = vmul.f32 %v1314, %v1283
        %v1320 = vmul.f32 %v1314, %v1284
        %v1321 = vmul.f32 %v1314, %v1285
        %v1322 = vmul.f32 %v1314, %v1286
        %v1323 = vmul.f32 %v1314, %v1287
        %v1324 = vmul.f32 %v1314, %v1288
        %v1325 = vmul.f32 %v1314, %v1289
        %v1326 = vmul.f32 %v1314, %v1290
        %v1327 = vmul.f32 %v1314, %v1291
        %v1328 = vmul.f32 %v1314, %v1292
        %v1329 = vmul.f32 %v1314, %v1293
        %v1330 = vmul.f32 %v1314, %v1294
        %v1331 = vmul.f32 %v1314, %v1295
        %v1332 = vmul.f32 %v1314, %v1296
        %v1333 = vmul.f32 %v1314, %v1297
        %v1334 = vmul.f32 %v1314, %v1298
        %v1335 = vmul.f32 %v1314, %v1299
        %v1336 = vmul.f32 %v1314, %v1300
        %v1337 = vmul.f32 %v1314, %v1301
        %v1338 = vmul.f32 %v1314, %v1302
        %v1339 = vmul.f32 %v1314, %v1303
        %v1340 = vmul.f32 %v1314, %v1304
        %v1341 = vmul.f32 %v1314, %v1305
        %v1342 = vmul.f32 %v1314, %v1306
        %v1343 = vmul.f32 %v1314, %v1307
        %v1344 = vmul.f32 %v1314, %v1308
        %v1345 = vmul.f32 %v1314, %v1309
        %v1346 = vmul.f32 %v1314, %v1310
        %v1347 = vadd.f32 %v1270, 1e-05
        %v1348 = vrsqrt.pop %v1347
        %v1349 = vlaneseq
        %v1350 = vshrl.u32 %v1349, 7
        %v1351 = vsub.s32 0, %v1350
        %v1352 = vrot.slane %v1348, %v1351
        %v1353 = vmul.f32 %v1315, %v1352
        %v1354 = vmul.f32 %v1316, %v1352
        %v1355 = vmul.f32 %v1317, %v1352
        %v1356 = vmul.f32 %v1318, %v1352
        %v1357 = vmul.f32 %v1319, %v1352
        %v1358 = vmul.f32 %v1320, %v1352
        %v1359 = vmul.f32 %v1321, %v1352
        %v1360 = vmul.f32 %v1322, %v1352
        %v1361 = vmul.f32 %v1323, %v1352
        %v1362 = vmul.f32 %v1324, %v1352
        %v1363 = vmul.f32 %v1325, %v1352
        %v1364 = vmul.f32 %v1326, %v1352
        %v1365 = vmul.f32 %v1327, %v1352
        %v1366 = vmul.f32 %v1328, %v1352
        %v1367 = vmul.f32 %v1329, %v1352
        %v1368 = vmul.f32 %v1330, %v1352
        %v1369 = vmul.f32 %v1331, %v1352
        %v1370 = vmul.f32 %v1332, %v1352
        %v1371 = vmul.f32 %v1333, %v1352
        %v1372 = vmul.f32 %v1334, %v1352
        %v1373 = vmul.f32 %v1335, %v1352
        %v1374 = vmul.f32 %v1336, %v1352
        %v1375 = vmul.f32 %v1337, %v1352
        %v1376 = vmul.f32 %v1338, %v1352
        %v1377 = vmul.f32 %v1339, %v1352
        %v1378 = vmul.f32 %v1340, %v1352
        %v1379 = vmul.f32 %v1341, %v1352
        %v1380 = vmul.f32 %v1342, %v1352
        %v1381 = vmul.f32 %v1343, %v1352
        %v1382 = vmul.f32 %v1344, %v1352
        %v1383 = vmul.f32 %v1345, %v1352
        %v1384 = vmul.f32 %v1346, %v1352
        %v1385 = vlaneseq
        %v1386 = vshrl.u32 %v1385, 7
        %v1387 = vsub.s32 2, %v1386
        %v1388 = vrot.slane %v349, %v1387
        %v1389 = vadd.f32 %v1353, %v1388
        %v1390 = vadd.f32 %v1354, %v1388
        %v1391 = vadd.f32 %v1355, %v1388
        %v1392 = vadd.f32 %v1356, %v1388
        %v1393 = vadd.f32 %v1357, %v1388
        %v1394 = vadd.f32 %v1358, %v1388
        %v1395 = vadd.f32 %v1359, %v1388
        %v1396 = vadd.f32 %v1360, %v1388
        %v1397 = vadd.f32 %v1361, %v1388
        %v1398 = vadd.f32 %v1362, %v1388
        %v1399 = vadd.f32 %v1363, %v1388
        %v1400 = vadd.f32 %v1364, %v1388
        %v1401 = vadd.f32 %v1365, %v1388
        %v1402 = vadd.f32 %v1366, %v1388
        %v1403 = vadd.f32 %v1367, %v1388
        %v1404 = vadd.f32 %v1368, %v1388
        %v1405 = vadd.f32 %v1369, %v1388
        %v1406 = vadd.f32 %v1370, %v1388
        %v1407 = vadd.f32 %v1371, %v1388
        %v1408 = vadd.f32 %v1372, %v1388
        %v1409 = vadd.f32 %v1373, %v1388
        %v1410 = vadd.f32 %v1374, %v1388
        %v1411 = vadd.f32 %v1375, %v1388
        %v1412 = vadd.f32 %v1376, %v1388
        %v1413 = vadd.f32 %v1377, %v1388
        %v1414 = vadd.f32 %v1378, %v1388
        %v1415 = vadd.f32 %v1379, %v1388
        %v1416 = vadd.f32 %v1380, %v1388
        %v1417 = vadd.f32 %v1381, %v1388
        %v1418 = vadd.f32 %v1382, %v1388
        %v1419 = vadd.f32 %v1383, %v1388
        %v1420 = vadd.f32 %v1384, %v1388
        %v1421 = vmax.f32 %v1389, 0.0
        %v1422 = vmax.f32 %v1390, 0.0
        %v1423 = vmax.f32 %v1391, 0.0
        %v1424 = vmax.f32 %v1392, 0.0
        %v1425 = vmax.f32 %v1393, 0.0
        %v1426 = vmax.f32 %v1394, 0.0
        %v1427 = vmax.f32 %v1395, 0.0
        %v1428 = vmax.f32 %v1396, 0.0
        %v1429 = vmax.f32 %v1397, 0.0
        %v1430 = vmax.f32 %v1398, 0.0
        %v1431 = vmax.f32 %v1399, 0.0
        %v1432 = vmax.f32 %v1400, 0.0
        %v1433 = vmax.f32 %v1401, 0.0
        %v1434 = vmax.f32 %v1402, 0.0
        %v1435 = vmax.f32 %v1403, 0.0
        %v1436 = vmax.f32 %v1404, 0.0
        %v1437 = vmax.f32 %v1405, 0.0
        %v1438 = vmax.f32 %v1406, 0.0
        %v1439 = vmax.f32 %v1407, 0.0
        %v1440 = vmax.f32 %v1408, 0.0
        %v1441 = vmax.f32 %v1409, 0.0
        %v1442 = vmax.f32 %v1410, 0.0
        %v1443 = vmax.f32 %v1411, 0.0
        %v1444 = vmax.f32 %v1412, 0.0
        %v1445 = vmax.f32 %v1413, 0.0
        %v1446 = vmax.f32 %v1414, 0.0
        %v1447 = vmax.f32 %v1415, 0.0
        %v1448 = vmax.f32 %v1416, 0.0
        %v1449 = vmax.f32 %v1417, 0.0
        %v1450 = vmax.f32 %v1418, 0.0
        %v1451 = vmax.f32 %v1419, 0.0
        %v1452 = vmax.f32 %v1420, 0.0
        %v1453 = vpack.c.bf16 %v1422, %v1421
        %v1454 = vpack.c.bf16 %v1424, %v1423
        %v1455 = vpack.c.bf16 %v1426, %v1425
        %v1456 = vpack.c.bf16 %v1428, %v1427
        %v1457 = vpack.c.bf16 %v1430, %v1429
        %v1458 = vpack.c.bf16 %v1432, %v1431
        %v1459 = vpack.c.bf16 %v1434, %v1433
        %v1460 = vpack.c.bf16 %v1436, %v1435
        %v1461 = vpack.c.bf16 %v1438, %v1437
        %v1462 = vpack.c.bf16 %v1440, %v1439
        %v1463 = vpack.c.bf16 %v1442, %v1441
        %v1464 = vpack.c.bf16 %v1444, %v1443
        %v1465 = vpack.c.bf16 %v1446, %v1445
        %v1466 = vpack.c.bf16 %v1448, %v1447
        %v1467 = vpack.c.bf16 %v1450, %v1449
        %v1468 = vpack.c.bf16 %v1452, %v1451
        %v1485 = vunpack.c.l.b16 %v433
        %v1486 = vunpack.c.l.b16 %v434
        %v1487 = vunpack.c.l.b16 %v435
        %v1488 = vunpack.c.l.b16 %v436
        %v1489 = vunpack.c.l.b16 %v437
        %v1490 = vunpack.c.l.b16 %v438
        %v1491 = vunpack.c.l.b16 %v439
        %v1492 = vunpack.c.l.b16 %v440
        %v1493 = vunpack.c.l.b16 %v441
        %v1494 = vunpack.c.l.b16 %v442
        %v1495 = vunpack.c.l.b16 %v443
        %v1496 = vunpack.c.l.b16 %v444
        %v1497 = vunpack.c.l.b16 %v445
        %v1498 = vunpack.c.l.b16 %v446
        %v1499 = vunpack.c.l.b16 %v447
        %v1500 = vunpack.c.l.b16 %v448
        %v1501 = vpack.c.b16 %v1486, %v1485
        %v1502 = vpack.c.b16 %v1488, %v1487
        %v1503 = vpack.c.b16 %v1490, %v1489
        %v1504 = vpack.c.b16 %v1492, %v1491
        %v1505 = vpack.c.b16 %v1494, %v1493
        %v1506 = vpack.c.b16 %v1496, %v1495
        %v1507 = vpack.c.b16 %v1498, %v1497
        %v1508 = vpack.c.b16 %v1500, %v1499
        %1517 = vmatprep.subr.bf16.mxu0 0
        %1518 = vmatpush1.bf16.msra.mxu0 %v1501
        %1519 = vmatprep.subr.bf16.mxu0 0
        %1520 = vmatpush1.bf16.msra.mxu0 %v1502
        %1521 = vmatprep.subr.bf16.mxu0 0
        %1522 = vmatpush1.bf16.msra.mxu0 %v1503
        %1523 = vmatprep.subr.bf16.mxu0 0
        %1524 = vmatpush1.bf16.msra.mxu0 %v1504
        %1525 = vmatprep.subr.bf16.mxu0 0
        %1526 = vmatpush1.bf16.msra.mxu0 %v1505
        %1527 = vmatprep.subr.bf16.mxu0 0
        %1528 = vmatpush1.bf16.msra.mxu0 %v1506
        %1529 = vmatprep.subr.bf16.mxu0 0
        %1530 = vmatpush1.bf16.msra.mxu0 %v1507
        %1531 = vmatprep.subr.bf16.mxu0 0
        %1532 = vmatpush1.bf16.msra.mxu0 %v1508
        %1533 = vmatprep.subr.bf16.mxu0 0
        %1534 = vmatpush1.bf16.msra.mxu0 0
        %1535 = vmatprep.subr.bf16.mxu0 0
        %1536 = vmatpush1.bf16.msra.mxu0 0
        %1537 = vmatprep.subr.bf16.mxu0 0
        %1538 = vmatpush1.bf16.msra.mxu0 0
        %1539 = vmatprep.subr.bf16.mxu0 0
        %1540 = vmatpush1.bf16.msra.mxu0 0
        %1541 = vmatprep.subr.bf16.mxu0 0
        %1542 = vmatpush1.bf16.msra.mxu0 0
        %1543 = vmatprep.subr.bf16.mxu0 0
        %1544 = vmatpush1.bf16.msra.mxu0 0
        %1545 = vmatprep.subr.bf16.mxu0 0
        %1546 = vmatpush1.bf16.msra.mxu0 0
        %1547 = vmatprep.subr.bf16.mxu0 0
        %1548 = vmatpush1.bf16.msra.mxu0 0
        %1549 = vmatprep.mubr.bf16.mxu0 0
        %1550 = vmatmul.mubr.bf16.gmra.mrb[0].mxu0 %v1453
        %v1551 = vpop.f32.mrb[0].mxu0
        %v1552 = vadd.f32 0.0, %v1551
        %v1553 = vpop.f32.mrb[0].mxu0
        %v1554 = vpop.f32.mrb[0].mxu0
        %v1555 = vadd.f32 0.0, %v1554
        %v1556 = vpop.f32.mrb[0].mxu0
        %1557 = vmatprep.mubr.bf16.mxu0 0
        %1558 = vmatmul.mubr.bf16.gmra.mrb[0].mxu0 %v1454
        %v1559 = vpop.f32.mrb[0].mxu0
        %v1560 = vadd.f32 0.0, %v1559
        %v1561 = vpop.f32.mrb[0].mxu0
        %v1562 = vpop.f32.mrb[0].mxu0
        %v1563 = vadd.f32 0.0, %v1562
        %v1564 = vpop.f32.mrb[0].mxu0
        %1565 = vmatprep.mubr.bf16.mxu0 0
        %1566 = vmatmul.mubr.bf16.gmra.mrb[0].mxu0 %v1455
        %v1567 = vpop.f32.mrb[0].mxu0
        %v1568 = vadd.f32 0.0, %v1567
        %v1569 = vpop.f32.mrb[0].mxu0
        %v1570 = vpop.f32.mrb[0].mxu0
        %v1571 = vadd.f32 0.0, %v1570
        %v1572 = vpop.f32.mrb[0].mxu0
        %1573 = vmatprep.mubr.bf16.mxu0 0
        %1574 = vmatmul.mubr.bf16.gmra.mrb[0].mxu0 %v1456
        %v1575 = vpop.f32.mrb[0].mxu0
        %v1576 = vadd.f32 0.0, %v1575
        %v1577 = vpop.f32.mrb[0].mxu0
        %v1578 = vpop.f32.mrb[0].mxu0
        %v1579 = vadd.f32 0.0, %v1578
        %v1580 = vpop.f32.mrb[0].mxu0
        %1581 = vmatprep.mubr.bf16.mxu0 0
        %1582 = vmatmul.mubr.bf16.gmra.mrb[0].mxu0 %v1457
        %v1583 = vpop.f32.mrb[0].mxu0
        %v1584 = vadd.f32 0.0, %v1583
        %v1585 = vpop.f32.mrb[0].mxu0
        %v1586 = vpop.f32.mrb[0].mxu0
        %v1587 = vadd.f32 0.0, %v1586
        %v1588 = vpop.f32.mrb[0].mxu0
        %1589 = vmatprep.mubr.bf16.mxu0 0
        %1590 = vmatmul.mubr.bf16.gmra.mrb[0].mxu0 %v1458
        %v1591 = vpop.f32.mrb[0].mxu0
        %v1592 = vadd.f32 0.0, %v1591
        %v1593 = vpop.f32.mrb[0].mxu0
        %v1594 = vpop.f32.mrb[0].mxu0
        %v1595 = vadd.f32 0.0, %v1594
        %v1596 = vpop.f32.mrb[0].mxu0
        %1597 = vmatprep.mubr.bf16.mxu0 0
        %1598 = vmatmul.mubr.bf16.gmra.mrb[0].mxu0 %v1459
        %v1599 = vpop.f32.mrb[0].mxu0
        %v1600 = vadd.f32 0.0, %v1599
        %v1601 = vpop.f32.mrb[0].mxu0
        %v1602 = vpop.f32.mrb[0].mxu0
        %v1603 = vadd.f32 0.0, %v1602
        %v1604 = vpop.f32.mrb[0].mxu0
        %1605 = vmatprep.mubr.bf16.mxu0 0
        %1606 = vmatmul.mubr.bf16.gmra.mrb[0].mxu0 %v1460
        %v1607 = vpop.f32.mrb[0].mxu0
        %v1608 = vadd.f32 0.0, %v1607
        %v1609 = vpop.f32.mrb[0].mxu0
        %v1610 = vpop.f32.mrb[0].mxu0
        %v1611 = vadd.f32 0.0, %v1610
        %v1612 = vpop.f32.mrb[0].mxu0
        %1613 = vmatprep.mubr.bf16.mxu0 0
        %1614 = vmatmul.mubr.bf16.gmra.mrb[0].mxu0 %v1461
        %v1615 = vpop.f32.mrb[0].mxu0
        %v1616 = vadd.f32 0.0, %v1615
        %v1617 = vpop.f32.mrb[0].mxu0
        %v1618 = vpop.f32.mrb[0].mxu0
        %v1619 = vadd.f32 0.0, %v1618
        %v1620 = vpop.f32.mrb[0].mxu0
        %1621 = vmatprep.mubr.bf16.mxu0 0
        %1622 = vmatmul.mubr.bf16.gmra.mrb[0].mxu0 %v1462
        %v1623 = vpop.f32.mrb[0].mxu0
        %v1624 = vadd.f32 0.0, %v1623
        %v1625 = vpop.f32.mrb[0].mxu0
        %v1626 = vpop.f32.mrb[0].mxu0
        %v1627 = vadd.f32 0.0, %v1626
        %v1628 = vpop.f32.mrb[0].mxu0
        %1629 = vmatprep.mubr.bf16.mxu0 0
        %1630 = vmatmul.mubr.bf16.gmra.mrb[0].mxu0 %v1463
        %v1631 = vpop.f32.mrb[0].mxu0
        %v1632 = vadd.f32 0.0, %v1631
        %v1633 = vpop.f32.mrb[0].mxu0
        %v1634 = vpop.f32.mrb[0].mxu0
        %v1635 = vadd.f32 0.0, %v1634
        %v1636 = vpop.f32.mrb[0].mxu0
        %1637 = vmatprep.mubr.bf16.mxu0 0
        %1638 = vmatmul.mubr.bf16.gmra.mrb[0].mxu0 %v1464
        %v1639 = vpop.f32.mrb[0].mxu0
        %v1640 = vadd.f32 0.0, %v1639
        %v1641 = vpop.f32.mrb[0].mxu0
        %v1642 = vpop.f32.mrb[0].mxu0
        %v1643 = vadd.f32 0.0, %v1642
        %v1644 = vpop.f32.mrb[0].mxu0
        %1645 = vmatprep.mubr.bf16.mxu0 0
        %1646 = vmatmul.mubr.bf16.gmra.mrb[0].mxu0 %v1465
        %v1647 = vpop.f32.mrb[0].mxu0
        %v1648 = vadd.f32 0.0, %v1647
        %v1649 = vpop.f32.mrb[0].mxu0
        %v1650 = vpop.f32.mrb[0].mxu0
        %v1651 = vadd.f32 0.0, %v1650
        %v1652 = vpop.f32.mrb[0].mxu0
        %1653 = vmatprep.mubr.bf16.mxu0 0
        %1654 = vmatmul.mubr.bf16.gmra.mrb[0].mxu0 %v1466
        %v1655 = vpop.f32.mrb[0].mxu0
        %v1656 = vadd.f32 0.0, %v1655
        %v1657 = vpop.f32.mrb[0].mxu0
        %v1658 = vpop.f32.mrb[0].mxu0
        %v1659 = vadd.f32 0.0, %v1658
        %v1660 = vpop.f32.mrb[0].mxu0
        %1661 = vmatprep.mubr.bf16.mxu0 0
        %1662 = vmatmul.mubr.bf16.gmra.mrb[0].mxu0 %v1467
        %v1663 = vpop.f32.mrb[0].mxu0
        %v1664 = vadd.f32 0.0, %v1663
        %v1665 = vpop.f32.mrb[0].mxu0
        %v1666 = vpop.f32.mrb[0].mxu0
        %v1667 = vadd.f32 0.0, %v1666
        %v1668 = vpop.f32.mrb[0].mxu0
        %1669 = vmatprep.mubr.bf16.mxu0 0
        %1670 = vmatmul.mubr.bf16.gmra.mrb[0].mxu0 %v1468
        %v1671 = vpop.f32.mrb[0].mxu0
        %v1672 = vadd.f32 0.0, %v1671
        %v1673 = vpop.f32.mrb[0].mxu0
        %v1674 = vpop.f32.mrb[0].mxu0
        %v1675 = vadd.f32 0.0, %v1674
        %v1676 = vpop.f32.mrb[0].mxu0
        %1677 = vdwg.mxu0
        %v1678 = vpack.c.bf16 %v1555, %v1552
        %v1679 = vpack.c.bf16 %v1563, %v1560
        %v1680 = vpack.c.bf16 %v1571, %v1568
        %v1681 = vpack.c.bf16 %v1579, %v1576
        %v1682 = vpack.c.bf16 %v1587, %v1584
        %v1683 = vpack.c.bf16 %v1595, %v1592
        %v1684 = vpack.c.bf16 %v1603, %v1600
        %v1685 = vpack.c.bf16 %v1611, %v1608
        %v1686 = vpack.c.bf16 %v1619, %v1616
        %v1687 = vpack.c.bf16 %v1627, %v1624
        %v1688 = vpack.c.bf16 %v1635, %v1632
        %v1689 = vpack.c.bf16 %v1643, %v1640
        %v1690 = vpack.c.bf16 %v1651, %v1648
        %v1691 = vpack.c.bf16 %v1659, %v1656
        %v1692 = vpack.c.bf16 %v1667, %v1664
        %v1693 = vpack.c.bf16 %v1675, %v1672
        %v1694 = vlaneseq
        %v1695 = vshrl.u32 %v1694, 7
        %v1696 = vsub.s32 4, %v1695
        %v1697 = vrot.slane %v349, %v1696
        %1698 = vmatprep.subr.bf16.mxu0 0
        %1699 = vmatpush1.bf16.msra.mxu0 %v1678
        %1700 = vmatprep.subr.bf16.mxu0 0
        %1701 = vmatpush1.bf16.msra.mxu0 %v1679
        %1702 = vmatprep.subr.bf16.mxu0 0
        %1703 = vmatpush1.bf16.msra.mxu0 %v1680
        %1704 = vmatprep.subr.bf16.mxu0 0
        %1705 = vmatpush1.bf16.msra.mxu0 %v1681
        %1706 = vmatprep.subr.bf16.mxu0 0
        %1707 = vmatpush1.bf16.msra.mxu0 %v1682
        %1708 = vmatprep.subr.bf16.mxu0 0
        %1709 = vmatpush1.bf16.msra.mxu0 %v1683
        %1710 = vmatprep.subr.bf16.mxu0 0
        %1711 = vmatpush1.bf16.msra.mxu0 %v1684
        %1712 = vmatprep.subr.bf16.mxu0 0
        %1713 = vmatpush1.bf16.msra.mxu0 %v1685
        %1714 = vmatprep.subr.bf16.mxu0 0
        %1715 = vmatpush1.bf16.msra.mxu0 %v1686
        %1716 = vmatprep.subr.bf16.mxu0 0
        %1717 = vmatpush1.bf16.msra.mxu0 %v1687
        %1718 = vmatprep.subr.bf16.mxu0 0
        %1719 = vmatpush1.bf16.msra.mxu0 %v1688
        %1720 = vmatprep.subr.bf16.mxu0 0
        %1721 = vmatpush1.bf16.msra.mxu0 %v1689
        %1722 = vmatprep.subr.bf16.mxu0 0
        %1723 = vmatpush1.bf16.msra.mxu0 %v1690
        %1724 = vmatprep.subr.bf16.mxu0 0
        %1725 = vmatpush1.bf16.msra.mxu0 %v1691
        %1726 = vmatprep.subr.bf16.mxu0 0
        %1727 = vmatpush1.bf16.msra.mxu0 %v1692
        %1728 = vmatprep.subr.bf16.mxu0 0
        %1729 = vmatpush1.bf16.msra.mxu0 %v1693
        %1730 = vmatprep.mubr.bf16.mxu0 %v563
        %1731 = vmatmul.mubr.bf16.gmra.mrb[0].mxu0 %v562
        %v1732 = vpop.f32.mrb[0].mxu0
        %v1733 = vadd.f32 %v1697, %v1732
        %v1734 = vpop.f32.mrb[0].mxu0
        %v1735 = vpop.f32.mrb[0].mxu0
        %v1736 = vadd.f32 %v1697, %v1735
        %v1737 = vpop.f32.mrb[0].mxu0
        %1738 = vmatprep.mubr.bf16.mxu0 %v565
        %1739 = vmatmul.mubr.bf16.gmra.mrb[0].mxu0 %v564
        %v1740 = vpop.f32.mrb[0].mxu0
        %v1741 = vadd.f32 %v1697, %v1740
        %v1742 = vpop.f32.mrb[0].mxu0
        %v1743 = vpop.f32.mrb[0].mxu0
        %v1744 = vadd.f32 %v1697, %v1743
        %v1745 = vpop.f32.mrb[0].mxu0
        %1746 = vmatprep.mubr.bf16.mxu0 %v567
        %1747 = vmatmul.mubr.bf16.gmra.mrb[0].mxu0 %v566
        %v1748 = vpop.f32.mrb[0].mxu0
        %v1749 = vadd.f32 %v1697, %v1748
        %v1750 = vpop.f32.mrb[0].mxu0
        %v1751 = vpop.f32.mrb[0].mxu0
        %v1752 = vadd.f32 %v1697, %v1751
        %v1753 = vpop.f32.mrb[0].mxu0
        %1754 = vmatprep.mubr.bf16.mxu0 %v569
        %1755 = vmatmul.mubr.bf16.gmra.mrb[0].mxu0 %v568
        %v1756 = vpop.f32.mrb[0].mxu0
        %v1757 = vadd.f32 %v1697, %v1756
        %v1758 = vpop.f32.mrb[0].mxu0
        %v1759 = vpop.f32.mrb[0].mxu0
        %v1760 = vadd.f32 %v1697, %v1759
        %v1761 = vpop.f32.mrb[0].mxu0
        %1762 = vmatprep.mubr.bf16.mxu0 %v571
        %1763 = vmatmul.mubr.bf16.gmra.mrb[0].mxu0 %v570
        %v1764 = vpop.f32.mrb[0].mxu0
        %v1765 = vadd.f32 %v1697, %v1764
        %v1766 = vpop.f32.mrb[0].mxu0
        %v1767 = vpop.f32.mrb[0].mxu0
        %v1768 = vadd.f32 %v1697, %v1767
        %v1769 = vpop.f32.mrb[0].mxu0
        %1770 = vmatprep.mubr.bf16.mxu0 %v573
        %1771 = vmatmul.mubr.bf16.gmra.mrb[0].mxu0 %v572
        %v1772 = vpop.f32.mrb[0].mxu0
        %v1773 = vadd.f32 %v1697, %v1772
        %v1774 = vpop.f32.mrb[0].mxu0
        %v1775 = vpop.f32.mrb[0].mxu0
        %v1776 = vadd.f32 %v1697, %v1775
        %v1777 = vpop.f32.mrb[0].mxu0
        %1778 = vmatprep.mubr.bf16.mxu0 %v575
        %1779 = vmatmul.mubr.bf16.gmra.mrb[0].mxu0 %v574
        %v1780 = vpop.f32.mrb[0].mxu0
        %v1781 = vadd.f32 %v1697, %v1780
        %v1782 = vpop.f32.mrb[0].mxu0
        %v1783 = vpop.f32.mrb[0].mxu0
        %v1784 = vadd.f32 %v1697, %v1783
        %v1785 = vpop.f32.mrb[0].mxu0
        %1786 = vmatprep.mubr.bf16.mxu0 %v577
        %1787 = vmatmul.mubr.bf16.gmra.mrb[0].mxu0 %v576
        %v1788 = vpop.f32.mrb[0].mxu0
        %v1789 = vadd.f32 %v1697, %v1788
        %v1790 = vpop.f32.mrb[0].mxu0
        %v1791 = vpop.f32.mrb[0].mxu0
        %v1792 = vadd.f32 %v1697, %v1791
        %v1793 = vpop.f32.mrb[0].mxu0
        %1794 = vmatprep.mubr.bf16.mxu0 %v579
        %1795 = vmatmul.mubr.bf16.gmra.mrb[0].mxu0 %v578
        %v1796 = vpop.f32.mrb[0].mxu0
        %v1797 = vadd.f32 %v1697, %v1796
        %v1798 = vpop.f32.mrb[0].mxu0
        %v1799 = vpop.f32.mrb[0].mxu0
        %v1800 = vadd.f32 %v1697, %v1799
        %v1801 = vpop.f32.mrb[0].mxu0
        %1802 = vmatprep.mubr.bf16.mxu0 %v581
        %1803 = vmatmul.mubr.bf16.gmra.mrb[0].mxu0 %v580
        %v1804 = vpop.f32.mrb[0].mxu0
        %v1805 = vadd.f32 %v1697, %v1804
        %v1806 = vpop.f32.mrb[0].mxu0
        %v1807 = vpop.f32.mrb[0].mxu0
        %v1808 = vadd.f32 %v1697, %v1807
        %v1809 = vpop.f32.mrb[0].mxu0
        %1810 = vmatprep.mubr.bf16.mxu0 %v583
        %1811 = vmatmul.mubr.bf16.gmra.mrb[0].mxu0 %v582
        %v1812 = vpop.f32.mrb[0].mxu0
        %v1813 = vadd.f32 %v1697, %v1812
        %v1814 = vpop.f32.mrb[0].mxu0
        %v1815 = vpop.f32.mrb[0].mxu0
        %v1816 = vadd.f32 %v1697, %v1815
        %v1817 = vpop.f32.mrb[0].mxu0
        %1818 = vmatprep.mubr.bf16.mxu0 %v585
        %1819 = vmatmul.mubr.bf16.gmra.mrb[0].mxu0 %v584
        %v1820 = vpop.f32.mrb[0].mxu0
        %v1821 = vadd.f32 %v1697, %v1820
        %v1822 = vpop.f32.mrb[0].mxu0
        %v1823 = vpop.f32.mrb[0].mxu0
        %v1824 = vadd.f32 %v1697, %v1823
        %v1825 = vpop.f32.mrb[0].mxu0
        %1826 = vmatprep.mubr.bf16.mxu0 %v587
        %1827 = vmatmul.mubr.bf16.gmra.mrb[0].mxu0 %v586
        %v1828 = vpop.f32.mrb[0].mxu0
        %v1829 = vadd.f32 %v1697, %v1828
        %v1830 = vpop.f32.mrb[0].mxu0
        %v1831 = vpop.f32.mrb[0].mxu0
        %v1832 = vadd.f32 %v1697, %v1831
        %v1833 = vpop.f32.mrb[0].mxu0
        %1834 = vmatprep.mubr.bf16.mxu0 %v589
        %1835 = vmatmul.mubr.bf16.gmra.mrb[0].mxu0 %v588
        %v1836 = vpop.f32.mrb[0].mxu0
        %v1837 = vadd.f32 %v1697, %v1836
        %v1838 = vpop.f32.mrb[0].mxu0
        %v1839 = vpop.f32.mrb[0].mxu0
        %v1840 = vadd.f32 %v1697, %v1839
        %v1841 = vpop.f32.mrb[0].mxu0
        %1842 = vmatprep.mubr.bf16.mxu0 %v591
        %1843 = vmatmul.mubr.bf16.gmra.mrb[0].mxu0 %v590
        %v1844 = vpop.f32.mrb[0].mxu0
        %v1845 = vadd.f32 %v1697, %v1844
        %v1846 = vpop.f32.mrb[0].mxu0
        %v1847 = vpop.f32.mrb[0].mxu0
        %v1848 = vadd.f32 %v1697, %v1847
        %v1849 = vpop.f32.mrb[0].mxu0
        %1850 = vmatprep.mubr.bf16.mxu0 %v593
        %1851 = vmatmul.mubr.bf16.gmra.mrb[0].mxu0 %v592
        %v1852 = vpop.f32.mrb[0].mxu0
        %v1853 = vadd.f32 %v1697, %v1852
        %v1854 = vpop.f32.mrb[0].mxu0
        %v1855 = vpop.f32.mrb[0].mxu0
        %v1856 = vadd.f32 %v1697, %v1855
        %v1857 = vpop.f32.mrb[0].mxu0
        %1858 = vdwg.mxu0
        %v1859 = vpack.c.bf16 %v1736, %v1733
        %v1860 = vpack.c.bf16 %v1744, %v1741
        %v1861 = vpack.c.bf16 %v1752, %v1749
        %v1862 = vpack.c.bf16 %v1760, %v1757
        %v1863 = vpack.c.bf16 %v1768, %v1765
        %v1864 = vpack.c.bf16 %v1776, %v1773
        %v1865 = vpack.c.bf16 %v1784, %v1781
        %v1866 = vpack.c.bf16 %v1792, %v1789
        %v1867 = vpack.c.bf16 %v1800, %v1797
        %v1868 = vpack.c.bf16 %v1808, %v1805
        %v1869 = vpack.c.bf16 %v1816, %v1813
        %v1870 = vpack.c.bf16 %v1824, %v1821
        %v1871 = vpack.c.bf16 %v1832, %v1829
        %v1872 = vpack.c.bf16 %v1840, %v1837
        %v1873 = vpack.c.bf16 %v1848, %v1845
        %v1874 = vpack.c.bf16 %v1856, %v1853
        %1875 = vmatprep.subr.bf16.mxu0 0
        %1876 = vmatpush1.bf16.msra.mxu0 %v1859
        %1877 = vmatprep.subr.bf16.mxu0 0
        %1878 = vmatpush1.bf16.msra.mxu0 %v1860
        %1879 = vmatprep.subr.bf16.mxu0 0
        %1880 = vmatpush1.bf16.msra.mxu0 %v1861
        %1881 = vmatprep.subr.bf16.mxu0 0
        %1882 = vmatpush1.bf16.msra.mxu0 %v1862
        %1883 = vmatprep.subr.bf16.mxu0 0
        %1884 = vmatpush1.bf16.msra.mxu0 %v1863
        %1885 = vmatprep.subr.bf16.mxu0 0
        %1886 = vmatpush1.bf16.msra.mxu0 %v1864
        %1887 = vmatprep.subr.bf16.mxu0 0
        %1888 = vmatpush1.bf16.msra.mxu0 %v1865
        %1889 = vmatprep.subr.bf16.mxu0 0
        %1890 = vmatpush1.bf16.msra.mxu0 %v1866
        %1891 = vmatprep.subr.bf16.mxu0 0
        %1892 = vmatpush1.bf16.msra.mxu0 %v1867
        %1893 = vmatprep.subr.bf16.mxu0 0
        %1894 = vmatpush1.bf16.msra.mxu0 %v1868
        %1895 = vmatprep.subr.bf16.mxu0 0
        %1896 = vmatpush1.bf16.msra.mxu0 %v1869
        %1897 = vmatprep.subr.bf16.mxu0 0
        %1898 = vmatpush1.bf16.msra.mxu0 %v1870
        %1899 = vmatprep.subr.bf16.mxu0 0
        %1900 = vmatpush1.bf16.msra.mxu0 %v1871
        %1901 = vmatprep.subr.bf16.mxu0 0
        %1902 = vmatpush1.bf16.msra.mxu0 %v1872
        %1903 = vmatprep.subr.bf16.mxu0 0
        %1904 = vmatpush1.bf16.msra.mxu0 %v1873
        %1905 = vmatprep.subr.bf16.mxu0 0
        %1906 = vmatpush1.bf16.msra.mxu0 %v1874
        %1907 = vmatprep.mubr.bf16.mxu0 1065369472
        %1908 = vmatmul.mubr.bf16.gmra.mrb[0].mxu0 1065369472
        %v1909 = vpop.f32.mrb[0].mxu0
        %v1910 = vadd.f32 0.0, %v1909
        %v1911 = vpop.f32.mrb[0].mxu0
        %v1912 = vpop.f32.mrb[0].mxu0
        %v1913 = vpop.f32.mrb[0].mxu0
        %1914 = vdwg.mxu0
        %v1915 = vmul.f32 %v1910, 0.00390625
        %v1916 = vmul.f32 %v1733, %v1733
        %v1917 = vmul.f32 %v1736, %v1736
        %v1918 = vmul.f32 %v1741, %v1741
        %v1919 = vmul.f32 %v1744, %v1744
        %v1920 = vmul.f32 %v1749, %v1749
        %v1921 = vmul.f32 %v1752, %v1752
        %v1922 = vmul.f32 %v1757, %v1757
        %v1923 = vmul.f32 %v1760, %v1760
        %v1924 = vmul.f32 %v1765, %v1765
        %v1925 = vmul.f32 %v1768, %v1768
        %v1926 = vmul.f32 %v1773, %v1773
        %v1927 = vmul.f32 %v1776, %v1776
        %v1928 = vmul.f32 %v1781, %v1781
        %v1929 = vmul.f32 %v1784, %v1784
        %v1930 = vmul.f32 %v1789, %v1789
        %v1931 = vmul.f32 %v1792, %v1792
        %v1932 = vmul.f32 %v1797, %v1797
        %v1933 = vmul.f32 %v1800, %v1800
        %v1934 = vmul.f32 %v1805, %v1805
        %v1935 = vmul.f32 %v1808, %v1808
        %v1936 = vmul.f32 %v1813, %v1813
        %v1937 = vmul.f32 %v1816, %v1816
        %v1938 = vmul.f32 %v1821, %v1821
        %v1939 = vmul.f32 %v1824, %v1824
        %v1940 = vmul.f32 %v1829, %v1829
        %v1941 = vmul.f32 %v1832, %v1832
        %v1942 = vmul.f32 %v1837, %v1837
        %v1943 = vmul.f32 %v1840, %v1840
        %v1944 = vmul.f32 %v1845, %v1845
        %v1945 = vmul.f32 %v1848, %v1848
        %v1946 = vmul.f32 %v1853, %v1853
        %v1947 = vmul.f32 %v1856, %v1856
        %v1948 = vpack.c.bf16 %v1917, %v1916
        %v1949 = vpack.c.bf16 %v1919, %v1918
        %v1950 = vpack.c.bf16 %v1921, %v1920
        %v1951 = vpack.c.bf16 %v1923, %v1922
        %v1952 = vpack.c.bf16 %v1925, %v1924
        %v1953 = vpack.c.bf16 %v1927, %v1926
        %v1954 = vpack.c.bf16 %v1929, %v1928
        %v1955 = vpack.c.bf16 %v1931, %v1930
        %v1956 = vpack.c.bf16 %v1933, %v1932
        %v1957 = vpack.c.bf16 %v1935, %v1934
        %v1958 = vpack.c.bf16 %v1937, %v1936
        %v1959 = vpack.c.bf16 %v1939, %v1938
        %v1960 = vpack.c.bf16 %v1941, %v1940
        %v1961 = vpack.c.bf16 %v1943, %v1942
        %v1962 = vpack.c.bf16 %v1945, %v1944
        %v1963 = vpack.c.bf16 %v1947, %v1946
        %1964 = vmatprep.subr.bf16.mxu0 0
        %1965 = vmatpush1.bf16.msra.mxu0 %v1948
        %1966 = vmatprep.subr.bf16.mxu0 0
        %1967 = vmatpush1.bf16.msra.mxu0 %v1949
        %1968 = vmatprep.subr.bf16.mxu0 0
        %1969 = vmatpush1.bf16.msra.mxu0 %v1950
        %1970 = vmatprep.subr.bf16.mxu0 0
        %1971 = vmatpush1.bf16.msra.mxu0 %v1951
        %1972 = vmatprep.subr.bf16.mxu0 0
        %1973 = vmatpush1.bf16.msra.mxu0 %v1952
        %1974 = vmatprep.subr.bf16.mxu0 0
        %1975 = vmatpush1.bf16.msra.mxu0 %v1953
        %1976 = vmatprep.subr.bf16.mxu0 0
        %1977 = vmatpush1.bf16.msra.mxu0 %v1954
        %1978 = vmatprep.subr.bf16.mxu0 0
        %1979 = vmatpush1.bf16.msra.mxu0 %v1955
        %1980 = vmatprep.subr.bf16.mxu0 0
        %1981 = vmatpush1.bf16.msra.mxu0 %v1956
        %1982 = vmatprep.subr.bf16.mxu0 0
        %1983 = vmatpush1.bf16.msra.mxu0 %v1957
        %1984 = vmatprep.subr.bf16.mxu0 0
        %1985 = vmatpush1.bf16.msra.mxu0 %v1958
        %1986 = vmatprep.subr.bf16.mxu0 0
        %1987 = vmatpush1.bf16.msra.mxu0 %v1959
        %1988 = vmatprep.subr.bf16.mxu0 0
        %1989 = vmatpush1.bf16.msra.mxu0 %v1960
        %1990 = vmatprep.subr.bf16.mxu0 0
        %1991 = vmatpush1.bf16.msra.mxu0 %v1961
        %1992 = vmatprep.subr.bf16.mxu0 0
        %1993 = vmatpush1.bf16.msra.mxu0 %v1962
        %1994 = vmatprep.subr.bf16.mxu0 0
        %1995 = vmatpush1.bf16.msra.mxu0 %v1963
        %1996 = vmatprep.mubr.bf16.mxu0 1065369472
        %1997 = vmatmul.mubr.bf16.gmra.mrb[0].mxu0 1065369472
        %v1998 = vpop.f32.mrb[0].mxu0
        %v1999 = vadd.f32 0.0, %v1998
        %v2000 = vpop.f32.mrb[0].mxu0
        %v2001 = vpop.f32.mrb[0].mxu0
        %v2002 = vpop.f32.mrb[0].mxu0
        %2003 = vdwg.mxu0
        %v2004 = vmul.f32 %v1999, 0.00390625
        %v2005 = vmul.f32 %v1915, %v1915
        %v2007 = vrot.slane %v2005, 1
        %v2009 = vmul.f32 %v1260, %v2007
        %v2011 = vrot.slane %v2009, 7
        %v2013 = vsub.f32 %v2004, %v2011
        %v2014 = vmax.f32 %v2013, 0.0
        %v2016 = vrot.slane %v1915, 1
        %v2018 = vmul.f32 %v349, %v2016
        %v2019 = vlaneseq
        %v2020 = vshrl.u32 %v2019, 7
        %v2021 = vsub.s32 7, %v2020
        %v2022 = vrot.slane %v2018, %v2021
        %v2023 = vsub.f32 %v1733, %v2022
        %v2024 = vsub.f32 %v1736, %v2022
        %v2025 = vsub.f32 %v1741, %v2022
        %v2026 = vsub.f32 %v1744, %v2022
        %v2027 = vsub.f32 %v1749, %v2022
        %v2028 = vsub.f32 %v1752, %v2022
        %v2029 = vsub.f32 %v1757, %v2022
        %v2030 = vsub.f32 %v1760, %v2022
        %v2031 = vsub.f32 %v1765, %v2022
        %v2032 = vsub.f32 %v1768, %v2022
        %v2033 = vsub.f32 %v1773, %v2022
        %v2034 = vsub.f32 %v1776, %v2022
        %v2035 = vsub.f32 %v1781, %v2022
        %v2036 = vsub.f32 %v1784, %v2022
        %v2037 = vsub.f32 %v1789, %v2022
        %v2038 = vsub.f32 %v1792, %v2022
        %v2039 = vsub.f32 %v1797, %v2022
        %v2040 = vsub.f32 %v1800, %v2022
        %v2041 = vsub.f32 %v1805, %v2022
        %v2042 = vsub.f32 %v1808, %v2022
        %v2043 = vsub.f32 %v1813, %v2022
        %v2044 = vsub.f32 %v1816, %v2022
        %v2045 = vsub.f32 %v1821, %v2022
        %v2046 = vsub.f32 %v1824, %v2022
        %v2047 = vsub.f32 %v1829, %v2022
        %v2048 = vsub.f32 %v1832, %v2022
        %v2049 = vsub.f32 %v1837, %v2022
        %v2050 = vsub.f32 %v1840, %v2022
        %v2051 = vsub.f32 %v1845, %v2022
        %v2052 = vsub.f32 %v1848, %v2022
        %v2053 = vsub.f32 %v1853, %v2022
        %v2054 = vsub.f32 %v1856, %v2022
        %v2055 = vlaneseq
        %v2056 = vshrl.u32 %v2055, 7
        %v2057 = vsub.s32 5, %v2056
        %v2058 = vrot.slane %v349, %v2057
        %v2059 = vmul.f32 %v2058, %v2023
        %v2060 = vmul.f32 %v2058, %v2024
        %v2061 = vmul.f32 %v2058, %v2025
        %v2062 = vmul.f32 %v2058, %v2026
        %v2063 = vmul.f32 %v2058, %v2027
        %v2064 = vmul.f32 %v2058, %v2028
        %v2065 = vmul.f32 %v2058, %v2029
        %v2066 = vmul.f32 %v2058, %v2030
        %v2067 = vmul.f32 %v2058, %v2031
        %v2068 = vmul.f32 %v2058, %v2032
        %v2069 = vmul.f32 %v2058, %v2033
        %v2070 = vmul.f32 %v2058, %v2034
        %v2071 = vmul.f32 %v2058, %v2035
        %v2072 = vmul.f32 %v2058, %v2036
        %v2073 = vmul.f32 %v2058, %v2037
        %v2074 = vmul.f32 %v2058, %v2038
        %v2075 = vmul.f32 %v2058, %v2039
        %v2076 = vmul.f32 %v2058, %v2040
        %v2077 = vmul.f32 %v2058, %v2041
        %v2078 = vmul.f32 %v2058, %v2042
        %v2079 = vmul.f32 %v2058, %v2043
        %v2080 = vmul.f32 %v2058, %v2044
        %v2081 = vmul.f32 %v2058, %v2045
        %v2082 = vmul.f32 %v2058, %v2046
        %v2083 = vmul.f32 %v2058, %v2047
        %v2084 = vmul.f32 %v2058, %v2048
        %v2085 = vmul.f32 %v2058, %v2049
        %v2086 = vmul.f32 %v2058, %v2050
        %v2087 = vmul.f32 %v2058, %v2051
        %v2088 = vmul.f32 %v2058, %v2052
        %v2089 = vmul.f32 %v2058, %v2053
        %v2090 = vmul.f32 %v2058, %v2054
        %v2091 = vadd.f32 %v2014, 1e-05
        %v2092 = vrsqrt.pop %v2091
        %v2093 = vlaneseq
        %v2094 = vshrl.u32 %v2093, 7
        %v2095 = vsub.s32 0, %v2094
        %v2096 = vrot.slane %v2092, %v2095
        %v2097 = vmul.f32 %v2059, %v2096
        %v2098 = vmul.f32 %v2060, %v2096
        %v2099 = vmul.f32 %v2061, %v2096
        %v2100 = vmul.f32 %v2062, %v2096
        %v2101 = vmul.f32 %v2063, %v2096
        %v2102 = vmul.f32 %v2064, %v2096
        %v2103 = vmul.f32 %v2065, %v2096
        %v2104 = vmul.f32 %v2066, %v2096
        %v2105 = vmul.f32 %v2067, %v2096
        %v2106 = vmul.f32 %v2068, %v2096
        %v2107 = vmul.f32 %v2069, %v2096
        %v2108 = vmul.f32 %v2070, %v2096
        %v2109 = vmul.f32 %v2071, %v2096
        %v2110 = vmul.f32 %v2072, %v2096
        %v2111 = vmul.f32 %v2073, %v2096
        %v2112 = vmul.f32 %v2074, %v2096
        %v2113 = vmul.f32 %v2075, %v2096
        %v2114 = vmul.f32 %v2076, %v2096
        %v2115 = vmul.f32 %v2077, %v2096
        %v2116 = vmul.f32 %v2078, %v2096
        %v2117 = vmul.f32 %v2079, %v2096
        %v2118 = vmul.f32 %v2080, %v2096
        %v2119 = vmul.f32 %v2081, %v2096
        %v2120 = vmul.f32 %v2082, %v2096
        %v2121 = vmul.f32 %v2083, %v2096
        %v2122 = vmul.f32 %v2084, %v2096
        %v2123 = vmul.f32 %v2085, %v2096
        %v2124 = vmul.f32 %v2086, %v2096
        %v2125 = vmul.f32 %v2087, %v2096
        %v2126 = vmul.f32 %v2088, %v2096
        %v2127 = vmul.f32 %v2089, %v2096
        %v2128 = vmul.f32 %v2090, %v2096
        %v2129 = vlaneseq
        %v2130 = vshrl.u32 %v2129, 7
        %v2131 = vsub.s32 6, %v2130
        %v2132 = vrot.slane %v349, %v2131
        %v2133 = vadd.f32 %v2097, %v2132
        %v2134 = vadd.f32 %v2098, %v2132
        %v2135 = vadd.f32 %v2099, %v2132
        %v2136 = vadd.f32 %v2100, %v2132
        %v2137 = vadd.f32 %v2101, %v2132
        %v2138 = vadd.f32 %v2102, %v2132
        %v2139 = vadd.f32 %v2103, %v2132
        %v2140 = vadd.f32 %v2104, %v2132
        %v2141 = vadd.f32 %v2105, %v2132
        %v2142 = vadd.f32 %v2106, %v2132
        %v2143 = vadd.f32 %v2107, %v2132
        %v2144 = vadd.f32 %v2108, %v2132
        %v2145 = vadd.f32 %v2109, %v2132
        %v2146 = vadd.f32 %v2110, %v2132
        %v2147 = vadd.f32 %v2111, %v2132
        %v2148 = vadd.f32 %v2112, %v2132
        %v2149 = vadd.f32 %v2113, %v2132
        %v2150 = vadd.f32 %v2114, %v2132
        %v2151 = vadd.f32 %v2115, %v2132
        %v2152 = vadd.f32 %v2116, %v2132
        %v2153 = vadd.f32 %v2117, %v2132
        %v2154 = vadd.f32 %v2118, %v2132
        %v2155 = vadd.f32 %v2119, %v2132
        %v2156 = vadd.f32 %v2120, %v2132
        %v2157 = vadd.f32 %v2121, %v2132
        %v2158 = vadd.f32 %v2122, %v2132
        %v2159 = vadd.f32 %v2123, %v2132
        %v2160 = vadd.f32 %v2124, %v2132
        %v2161 = vadd.f32 %v2125, %v2132
        %v2162 = vadd.f32 %v2126, %v2132
        %v2163 = vadd.f32 %v2127, %v2132
        %v2164 = vadd.f32 %v2128, %v2132
        %v2165 = vmax.f32 %v2133, 0.0
        %v2166 = vmax.f32 %v2134, 0.0
        %v2167 = vmax.f32 %v2135, 0.0
        %v2168 = vmax.f32 %v2136, 0.0
        %v2169 = vmax.f32 %v2137, 0.0
        %v2170 = vmax.f32 %v2138, 0.0
        %v2171 = vmax.f32 %v2139, 0.0
        %v2172 = vmax.f32 %v2140, 0.0
        %v2173 = vmax.f32 %v2141, 0.0
        %v2174 = vmax.f32 %v2142, 0.0
        %v2175 = vmax.f32 %v2143, 0.0
        %v2176 = vmax.f32 %v2144, 0.0
        %v2177 = vmax.f32 %v2145, 0.0
        %v2178 = vmax.f32 %v2146, 0.0
        %v2179 = vmax.f32 %v2147, 0.0
        %v2180 = vmax.f32 %v2148, 0.0
        %v2181 = vmax.f32 %v2149, 0.0
        %v2182 = vmax.f32 %v2150, 0.0
        %v2183 = vmax.f32 %v2151, 0.0
        %v2184 = vmax.f32 %v2152, 0.0
        %v2185 = vmax.f32 %v2153, 0.0
        %v2186 = vmax.f32 %v2154, 0.0
        %v2187 = vmax.f32 %v2155, 0.0
        %v2188 = vmax.f32 %v2156, 0.0
        %v2189 = vmax.f32 %v2157, 0.0
        %v2190 = vmax.f32 %v2158, 0.0
        %v2191 = vmax.f32 %v2159, 0.0
        %v2192 = vmax.f32 %v2160, 0.0
        %v2193 = vmax.f32 %v2161, 0.0
        %v2194 = vmax.f32 %v2162, 0.0
        %v2195 = vmax.f32 %v2163, 0.0
        %v2196 = vmax.f32 %v2164, 0.0
        %v2197 = vpack.c.bf16 %v2166, %v2165
        %v2198 = vpack.c.bf16 %v2168, %v2167
        %v2199 = vpack.c.bf16 %v2170, %v2169
        %v2200 = vpack.c.bf16 %v2172, %v2171
        %v2201 = vpack.c.bf16 %v2174, %v2173
        %v2202 = vpack.c.bf16 %v2176, %v2175
        %v2203 = vpack.c.bf16 %v2178, %v2177
        %v2204 = vpack.c.bf16 %v2180, %v2179
        %v2205 = vpack.c.bf16 %v2182, %v2181
        %v2206 = vpack.c.bf16 %v2184, %v2183
        %v2207 = vpack.c.bf16 %v2186, %v2185
        %v2208 = vpack.c.bf16 %v2188, %v2187
        %v2209 = vpack.c.bf16 %v2190, %v2189
        %v2210 = vpack.c.bf16 %v2192, %v2191
        %v2211 = vpack.c.bf16 %v2194, %v2193
        %v2212 = vpack.c.bf16 %v2196, %v2195
        %v2214 = vunpack.c.l.b16 %v415
        %v2215 = vunpack.c.h.b16 %v415
        %v2216 = vpack.c.b16 %v2214, %v2214
        %v2217 = vpack.c.b16 %v2215, %v2215
        %2220 = vmatprep.subr.bf16.mxu0 0
        %2221 = vmatpush1.bf16.msra.mxu0 %v2197
        %2222 = vmatprep.subr.bf16.mxu0 0
        %2223 = vmatpush1.bf16.msra.mxu0 %v2198
        %2224 = vmatprep.subr.bf16.mxu0 0
        %2225 = vmatpush1.bf16.msra.mxu0 %v2199
        %2226 = vmatprep.subr.bf16.mxu0 0
        %2227 = vmatpush1.bf16.msra.mxu0 %v2200
        %2228 = vmatprep.subr.bf16.mxu0 0
        %2229 = vmatpush1.bf16.msra.mxu0 %v2201
        %2230 = vmatprep.subr.bf16.mxu0 0
        %2231 = vmatpush1.bf16.msra.mxu0 %v2202
        %2232 = vmatprep.subr.bf16.mxu0 0
        %2233 = vmatpush1.bf16.msra.mxu0 %v2203
        %2234 = vmatprep.subr.bf16.mxu0 0
        %2235 = vmatpush1.bf16.msra.mxu0 %v2204
        %2236 = vmatprep.subr.bf16.mxu0 0
        %2237 = vmatpush1.bf16.msra.mxu0 %v2205
        %2238 = vmatprep.subr.bf16.mxu0 0
        %2239 = vmatpush1.bf16.msra.mxu0 %v2206
        %2240 = vmatprep.subr.bf16.mxu0 0
        %2241 = vmatpush1.bf16.msra.mxu0 %v2207
        %2242 = vmatprep.subr.bf16.mxu0 0
        %2243 = vmatpush1.bf16.msra.mxu0 %v2208
        %2244 = vmatprep.subr.bf16.mxu0 0
        %2245 = vmatpush1.bf16.msra.mxu0 %v2209
        %2246 = vmatprep.subr.bf16.mxu0 0
        %2247 = vmatpush1.bf16.msra.mxu0 %v2210
        %2248 = vmatprep.subr.bf16.mxu0 0
        %2249 = vmatpush1.bf16.msra.mxu0 %v2211
        %2250 = vmatprep.subr.bf16.mxu0 0
        %2251 = vmatpush1.bf16.msra.mxu0 %v2212
        %2252 = vmatprep.mubr.bf16.mxu0 %v2217
        %2253 = vmatmul.mubr.bf16.gmra.mrb[0].mxu0 %v2216
        %v2254 = vpop.f32.mrb[0].mxu0
        %v2255 = vadd.f32 0.0, %v2254
        %v2256 = vpop.f32.mrb[0].mxu0
        %v2257 = vpop.f32.mrb[0].mxu0
        %v2258 = vpop.f32.mrb[0].mxu0
        %2259 = vdwg.mxu0
        %v2260 = vpack.c.bf16 %v2255, %v2255
        %v2261 = vlaneseq
        %v2262 = vshrl.u32 %v2261, 7
        %v2263 = vsub.s32 0, %v2262
        %v2264 = vrot.slane %v350, %v2263
        %v2281 = vunpack.c.l.b16 %v450
        %v2282 = vunpack.c.l.b16 %v451
        %v2283 = vunpack.c.l.b16 %v452
        %v2284 = vunpack.c.l.b16 %v453
        %v2285 = vunpack.c.l.b16 %v454
        %v2286 = vunpack.c.l.b16 %v455
        %v2287 = vunpack.c.l.b16 %v456
        %v2288 = vunpack.c.l.b16 %v457
        %v2289 = vunpack.c.l.b16 %v458
        %v2290 = vunpack.c.l.b16 %v459
        %v2291 = vunpack.c.l.b16 %v460
        %v2292 = vunpack.c.l.b16 %v461
        %v2293 = vunpack.c.l.b16 %v462
        %v2294 = vunpack.c.l.b16 %v463
        %v2295 = vunpack.c.l.b16 %v464
        %v2296 = vunpack.c.l.b16 %v465
        %v2297 = vpack.c.b16 %v2282, %v2281
        %v2298 = vpack.c.b16 %v2284, %v2283
        %v2299 = vpack.c.b16 %v2286, %v2285
        %v2300 = vpack.c.b16 %v2288, %v2287
        %v2301 = vpack.c.b16 %v2290, %v2289
        %v2302 = vpack.c.b16 %v2292, %v2291
        %v2303 = vpack.c.b16 %v2294, %v2293
        %v2304 = vpack.c.b16 %v2296, %v2295
        %2313 = vmatprep.subr.bf16.mxu0 0
        %2314 = vmatpush1.bf16.msra.mxu0 %v2297
        %2315 = vmatprep.subr.bf16.mxu0 0
        %2316 = vmatpush1.bf16.msra.mxu0 %v2298
        %2317 = vmatprep.subr.bf16.mxu0 0
        %2318 = vmatpush1.bf16.msra.mxu0 %v2299
        %2319 = vmatprep.subr.bf16.mxu0 0
        %2320 = vmatpush1.bf16.msra.mxu0 %v2300
        %2321 = vmatprep.subr.bf16.mxu0 0
        %2322 = vmatpush1.bf16.msra.mxu0 %v2301
        %2323 = vmatprep.subr.bf16.mxu0 0
        %2324 = vmatpush1.bf16.msra.mxu0 %v2302
        %2325 = vmatprep.subr.bf16.mxu0 0
        %2326 = vmatpush1.bf16.msra.mxu0 %v2303
        %2327 = vmatprep.subr.bf16.mxu0 0
        %2328 = vmatpush1.bf16.msra.mxu0 %v2304
        %2329 = vmatprep.subr.bf16.mxu0 0
        %2330 = vmatpush1.bf16.msra.mxu0 0
        %2331 = vmatprep.subr.bf16.mxu0 0
        %2332 = vmatpush1.bf16.msra.mxu0 0
        %2333 = vmatprep.subr.bf16.mxu0 0
        %2334 = vmatpush1.bf16.msra.mxu0 0
        %2335 = vmatprep.subr.bf16.mxu0 0
        %2336 = vmatpush1.bf16.msra.mxu0 0
        %2337 = vmatprep.subr.bf16.mxu0 0
        %2338 = vmatpush1.bf16.msra.mxu0 0
        %2339 = vmatprep.subr.bf16.mxu0 0
        %2340 = vmatpush1.bf16.msra.mxu0 0
        %2341 = vmatprep.subr.bf16.mxu0 0
        %2342 = vmatpush1.bf16.msra.mxu0 0
        %2343 = vmatprep.subr.bf16.mxu0 0
        %2344 = vmatpush1.bf16.msra.mxu0 0
        %2345 = vmatprep.mubr.bf16.mxu0 0
        %2346 = vmatmul.mubr.bf16.gmra.mrb[0].mxu0 %v2260
        %v2347 = vpop.f32.mrb[0].mxu0
        %v2348 = vadd.f32 %v2264, %v2347
        %v2349 = vpop.f32.mrb[0].mxu0
        %v2350 = vpop.f32.mrb[0].mxu0
        %v2351 = vpop.f32.mrb[0].mxu0
        %2352 = vdwg.mxu0
        %2353 = vst [vmem:[%s346] sm:$0xff] %v2348
        %s2354 = sand.u32 %s154, 1
        %s2355 = scalar_lea.sflag [#allocation4], %s2354
        %s2356 = sand.u32 %s154, 1
        %s2357 = smul.addr %s2356, 8
        %s2358 = scalar_lea.vmem [#allocation11], %s2357
        // Predicated region
        $region61: #{tpu_custom_call.1} parent=39 // pred_check
          %p2359 = pneg %p164
        $region62: #{tpu_custom_call.1} parent=39 // pred_check_branch
          %2361 = sbr.rel (%p2359) target = $region64
        $region63: #{tpu_custom_call.1} parent=39 // pred_region
          %s2363 = ssub.s32 128, 128
          %2364 = vsyncadd %s2355, %s2363
          %s2365 = smul.addr %s26, 128
          %s2366 = scalar_lea.hbm %s5, %s2365
          %s2368 = sshll.u32 %s2358, 4
          %s2369 = int_to_ptr.vmem [resolvable:$true] %s2368
          %2371 = dma.vmem_to_hbm [thread:$0]  %s2369, 128, %s2366, %s2355
        $region64: #{tpu_custom_call.1} parent=39 // pred_fallthru
          _
      $region40: #{tpu_custom_call.1} parent=5 // pred_fallthru
        _
      %p2372 = scmp.le.s32.totalorder 2, %s21
      // Predicated region
      $region65: #{tpu_custom_call.1} parent=5 // pred_check
        %p2373 = pneg %p2372
      $region66: #{tpu_custom_call.1} parent=5 // pred_check_branch
        %2375 = sbr.rel (%p2373) target = $region68
      $region67: #{tpu_custom_call.1} parent=5 // pred_region
        %s2376 = ssub.s32 %s21, 2
        // Predicated region
        $region69: #{tpu_custom_call.1} parent=67 // pred_check
          %p2377 = pneg %p170
        $region70: #{tpu_custom_call.1} parent=67 // pred_check_branch
          %2379 = sbr.rel (%p2377) target = $region72
        $region71: #{tpu_custom_call.1} parent=67 // pred_region
          %s2380 = sand.u32 %s155, 1
          %s2381 = scalar_lea.sflag [#allocation4], %s2380
          %s2382 = sand.u32 %s155, 1
          %s2383 = smul.addr %s2382, 8
          %s2384 = scalar_lea.vmem [#allocation11], %s2383
          %2385 = dma.done %s2381, 128
        $region72: #{tpu_custom_call.1} parent=67 // pred_fallthru
          _
      $region68: #{tpu_custom_call.1} parent=5 // pred_fallthru
        _
    $region6: #{tpu_custom_call.1} parent=1 // loop_footer
      %s25 = sadd.s32 1, %s21
    $region7: #{tpu_custom_call.1} parent=1 // loop_footer_branch
      %20 = sbr.rel target = $region3
    $region8: #{tpu_custom_call.1} parent=1 // loop_exit
      _
    %2386 = vsyncpa [#allocation3], 1
    %s2387 = scalar_lea.sflag [#allocation3], 1
    %2388 = vsyncpa %s2387, 1
    %2389 = vsyncpa [#allocation6], 1
    %s2390 = scalar_lea.sflag [#allocation6], 1
    %2391 = vsyncpa %s2390, 1
    %2392 = vsyncpa [#allocation9], 1
    %2393 = vsyncpa [#allocation4], 1
    %s2394 = scalar_lea.sflag [#allocation4], 1
    %2395 = vsyncpa %s2394, 1

</llo_original>
